<compile_context>
chip_gen: v5e
topology: v5e:2x2
jax: 0.10.0
libtpu: 0.0.40
codegen_flags: <defaults>
</compile_context>

<pallas_src>
import functools

import jax
import jax.numpy as jnp
from jax import lax
from jax.experimental import pallas as pl
from jax.experimental.pallas import tpu as pltpu


def _make_attention_kernel(master_node: bool, n_nodes: int, tb: int):
    def kernel(x_ref, w1_ref, b1_ref, w2_ref, w3_ref, b3_ref, out_ref):
        x = x_ref[...]                                   # (TB, N, D) f32
        d = x.shape[-1]
        xf = x.reshape(tb * n_nodes, d)                  # fold batch*node for fc1

        # fc1 + tanh -> (TB*N, H): one MXU matmul with M = TB*N.
        h = jnp.tanh(
            jnp.dot(xf, w1_ref[...], preferred_element_type=jnp.float32)
            + b1_ref[...]
        )
        h = h.reshape(tb, n_nodes, h.shape[-1])          # (TB, N, H)

        # fc2 (no bias) + tanh -> (TB, N, 1).  Keep as VPU broadcast-multiply +
        # XLU lane reduce; a 1-column MXU matmul would just waste the MXU.
        s = jnp.tanh(jnp.sum(h * w2_ref[...], axis=-1, keepdims=True))

        # Node-index iota, broadcastable against (TB, N, 1).
        node_idx = lax.broadcasted_iota(jnp.int32, (n_nodes, 1), 0)  # (N, 1)

        if master_node:
            # Exclude the last ("master") node from the softmax.
            s = jnp.where(node_idx < (n_nodes - 1), s, -jnp.inf)

        # Softmax over the node dimension (dim=1 in the PyTorch module).
        m = jnp.max(s, axis=1, keepdims=True)
        e = jnp.exp(s - m)
        a = e / jnp.sum(e, axis=1, keepdims=True)        # (TB, N, 1); masked rows -> 0

        # Attention-weighted sum of the raw inputs -> (TB, D).
        # VPU multiply + sublane reduce; MXU stays free for fc1/fc3.
        t = jnp.sum(a * x, axis=1)

        # fc3 + relu -> (TB, H): one MXU matmul for the whole block.
        t = jnp.maximum(
            jnp.dot(t, w3_ref[...], preferred_element_type=jnp.float32)
            + b3_ref[...],
            0.0,
        )

        if master_node:
            # Extract the master node's raw features with a 0/1 mask + sublane
            # reduce (avoids a mid-dim squeeze relayout), then lane-concat.
            is_master = (node_idx == (n_nodes - 1)).astype(x.dtype)   # (N, 1)
            master_feats = jnp.sum(is_master * x, axis=1)              # (TB, D)
            out_ref[...] = jnp.concatenate([t, master_feats], axis=1)  # (TB, 2H)
        else:
            out_ref[...] = t                                            # (TB, H)

    return kernel


@functools.partial(jax.jit, static_argnames=("master_node", "block_b"))
def attention_forward(x_in, w1, b1, w2, w3, b3, *, master_node: bool,
                      block_b: int = 32):
    """x_in: (B, N, D) f32.  w1/w3 stored as (in, out); w2 keeps PyTorch's
    (1, nhid) fc2.weight layout; b1/b3 are (1, nhid).  Returns (B, H), or
    (B, 2H) if master_node.  `block_b` = batch rows per grid step (keep it a
    multiple of 8; block_b * N >= 256 fills a v6e/v7x MXU pass)."""
    B, N, D = x_in.shape
    Din, H = w1.shape
    assert Din == D, "fc1 input dim must match x_in feature dim"
    assert D == H and w3.shape == (H, H), "module requires in_features == nhid"
    out_dim = 2 * H if master_node else H

    TB = int(block_b)
    n_blocks = pl.cdiv(B, TB)
    B_pad = n_blocks * TB
    if B_pad != B:
        # Zero-pad the batch dim; padded rows are discarded after the call.
        x_in = jnp.pad(x_in, ((0, B_pad - B), (0, 0), (0, 0)))

    kernel = _make_attention_kernel(master_node, N, TB)

    cost = pl.CostEstimate(
        flops=2 * B_pad * N * D * H      # fc1
        + 2 * B_pad * N * H              # fc2 score
        + 2 * B_pad * N * D              # weighted sum
        + 2 * B_pad * D * H,             # fc3
        transcendentals=B_pad * N * (H + 2),            # tanh(h), tanh(s), exp
        bytes_accessed=4 * (B_pad * N * D + D * H + 3 * H + H * H
                            + B_pad * out_dim),
    )

    out = pl.pallas_call(
        kernel,
        out_shape=jax.ShapeDtypeStruct((B_pad, out_dim), jnp.float32),
        grid=(n_blocks,),
        in_specs=[
            pl.BlockSpec((TB, N, D), lambda b: (b, 0, 0)),   # x_in, TB batch rows
            pl.BlockSpec((D, H), lambda b: (0, 0)),          # w1 (constant block)
            pl.BlockSpec((1, H), lambda b: (0, 0)),          # b1
            pl.BlockSpec((1, H), lambda b: (0, 0)),          # w2 (fc2.weight)
            pl.BlockSpec((H, H), lambda b: (0, 0)),          # w3
            pl.BlockSpec((1, H), lambda b: (0, 0)),          # b3
        ],
        out_specs=pl.BlockSpec((TB, out_dim), lambda b: (b, 0)),
        compiler_params=pltpu.CompilerParams(
            dimension_semantics=("parallel",)),
        cost_estimate=cost,
    )(x_in, w1, b1, w2, w3, b3)

    return out[:B]


def attention_ref(x_in, w1, b1, w2, w3, b3, *, master_node: bool):
    """Pure-JAX reference mirroring the PyTorch forward."""
    h = jnp.tanh(x_in @ w1 + b1)                       # (B, N, H)
    s = jnp.tanh(jnp.einsum("bnh,oh->bno", h, w2))     # (B, N, 1)
    if master_node:
        a = jax.nn.softmax(s[:, :-1, :], axis=1)
        t = jnp.sum(a * x_in[:, :-1, :], axis=1)       # (B, D)
        t = jax.nn.relu(t @ w3 + b3)
        return jnp.concatenate([t, x_in[:, -1, :]], axis=1)
    else:
        a = jax.nn.softmax(s, axis=1)
        t = jnp.sum(a * x_in, axis=1)                  # (B, D)
        return jax.nn.relu(t @ w3 + b3)


if __name__ == "__main__":
    # Small shapes: nodes=8, in_features = nhid = 32 (module requires D == H).
    N, D = 8, 32
    H = D

    key = jax.random.PRNGKey(0)
    kx, k1, kb1, k2, k3, kb3 = jax.random.split(key, 6)

    # Deterministic synthetic parameters (shapes from nn.Linear definitions;
    # (in, out) for fc1/fc3, PyTorch (out, in) = (1, H) for fc2).
    w1 = jax.random.normal(k1, (D, H), dtype=jnp.float32) * 0.1
    b1 = jax.random.normal(kb1, (1, H), dtype=jnp.float32) * 0.1
    w2 = jax.random.normal(k2, (1, H), dtype=jnp.float32) * 0.1   # fc2.weight, no bias
    w3 = jax.random.normal(k3, (H, H), dtype=jnp.float32) * 0.1
    b3 = jax.random.normal(kb3, (1, H), dtype=jnp.float32) * 0.1

    ok = True
    # (batch, block_b, master_node): covers pad-heavy single-step and
    # multi-step grids for both master_node settings.
    for B, TB, master_node in [(6, 32, False), (6, 32, True),
                               (20, 8, True), (20, 8, False)]:
        x_in = jax.random.normal(jax.random.fold_in(kx, B), (B, N, D),
                                 dtype=jnp.float32)
        out = attention_forward(x_in, w1, b1, w2, w3, b3,
                                master_node=master_node, block_b=TB)
        out = jax.block_until_ready(out)
        ref = attention_ref(x_in, w1, b1, w2, w3, b3, master_node=master_node)
        if not jnp.allclose(out, ref, atol=1e-5, rtol=1e-5):
            ok = False

    if ok:
        print("KERNEL_OK")
</pallas_src>

<mosaic_0001>
module attributes {stable_mosaic.version = 11 : i64} {
  func.func @kernel(%arg0: i32, %arg1: memref<32x8x32xf32, #tpu.memory_space<vmem>>, %arg2: memref<32x32xf32, #tpu.memory_space<vmem>>, %arg3: memref<1x32xf32, #tpu.memory_space<vmem>>, %arg4: memref<1x32xf32, #tpu.memory_space<vmem>>, %arg5: memref<32x32xf32, #tpu.memory_space<vmem>>, %arg6: memref<1x32xf32, #tpu.memory_space<vmem>>, %arg7: memref<32x32xf32, #tpu.memory_space<vmem>>) attributes {dimension_semantics = [#tpu.dimension_semantics<parallel>], iteration_bounds = array<i64: 1>, scalar_prefetch = 0 : i64, scratch_operands = 0 : i64, tpu.core_type = #tpu.core_type<tc>, window_params = [{transform_indices = @transform_0, window_bounds = array<i64: 32, 8, 32>}, {pipeline_mode = #tpu.pipeline_mode<synchronous>, transform_indices = @transform_1, window_bounds = array<i64: 32, 32>}, {pipeline_mode = #tpu.pipeline_mode<synchronous>, transform_indices = @transform_2, window_bounds = array<i64: 1, 32>}, {pipeline_mode = #tpu.pipeline_mode<synchronous>, transform_indices = @transform_3, window_bounds = array<i64: 1, 32>}, {pipeline_mode = #tpu.pipeline_mode<synchronous>, transform_indices = @transform_4, window_bounds = array<i64: 32, 32>}, {pipeline_mode = #tpu.pipeline_mode<synchronous>, transform_indices = @transform_5, window_bounds = array<i64: 1, 32>}, {transform_indices = @transform_6, window_bounds = array<i64: 32, 32>}]} {
    %c0 = arith.constant 0 : index
    %c0_0 = arith.constant 0 : index
    %c0_1 = arith.constant 0 : index
    %0 = vector.load %arg1[%c0, %c0_0, %c0_1] : memref<32x8x32xf32, #tpu.memory_space<vmem>>, vector<32x8x32xf32>
    %1 = vector.shape_cast %0 : vector<32x8x32xf32> to vector<256x32xf32>
    %c0_2 = arith.constant 0 : index
    %c0_3 = arith.constant 0 : index
    %2 = vector.load %arg2[%c0_2, %c0_3] : memref<32x32xf32, #tpu.memory_space<vmem>>, vector<32x32xf32>
    %cst = arith.constant dense<0.000000e+00> : vector<256x32xf32>
    %3 = tpu.matmul %1, %2, %cst {dimension_numbers = #tpu.dot_dimension_numbers<[1], [0], [0], [1], [0, 0, 1, 1], [], []>} : vector<256x32xf32>, vector<32x32xf32>, vector<256x32xf32> -> vector<256x32xf32>
    %c0_4 = arith.constant 0 : index
    %c0_5 = arith.constant 0 : index
    %4 = vector.load %arg3[%c0_4, %c0_5] : memref<1x32xf32, #tpu.memory_space<vmem>>, vector<1x32xf32>
    %5 = vector.broadcast %4 : vector<1x32xf32> to vector<256x32xf32>
    %6 = arith.addf %3, %5 : vector<256x32xf32>
    %7 = math.tanh %6 : vector<256x32xf32>
    %8 = vector.shape_cast %7 : vector<256x32xf32> to vector<32x8x32xf32>
    %c0_6 = arith.constant 0 : index
    %c0_7 = arith.constant 0 : index
    %9 = vector.load %arg4[%c0_6, %c0_7] : memref<1x32xf32, #tpu.memory_space<vmem>>, vector<1x32xf32>
    %10 = vector.shape_cast %9 : vector<1x32xf32> to vector<1x1x32xf32>
    %11 = vector.broadcast %10 : vector<1x1x32xf32> to vector<32x8x32xf32>
    %12 = arith.mulf %8, %11 : vector<32x8x32xf32>
    %cst_8 = arith.constant dense<0.000000e+00> : vector<32x8xf32>
    %13 = vector.multi_reduction <add>, %12, %cst_8 [2] : vector<32x8x32xf32> to vector<32x8xf32>
    %14 = vector.shape_cast %13 : vector<32x8xf32> to vector<32x8x1xf32>
    %15 = math.tanh %14 : vector<32x8x1xf32>
    %cst_9 = arith.constant dense<0xFF800000> : vector<32x1xf32>
    %16 = vector.multi_reduction <maximumf>, %15, %cst_9 [1] : vector<32x8x1xf32> to vector<32x1xf32>
    %17 = vector.shape_cast %16 : vector<32x1xf32> to vector<32x1x1xf32>
    %18 = vector.broadcast %17 : vector<32x1x1xf32> to vector<32x8x1xf32>
    %19 = arith.subf %15, %18 : vector<32x8x1xf32>
    %20 = math.exp %19 : vector<32x8x1xf32>
    %cst_10 = arith.constant dense<0.000000e+00> : vector<32x1xf32>
    %21 = vector.multi_reduction <add>, %20, %cst_10 [1] : vector<32x8x1xf32> to vector<32x1xf32>
    %22 = vector.shape_cast %21 : vector<32x1xf32> to vector<32x1x1xf32>
    %23 = vector.broadcast %22 : vector<32x1x1xf32> to vector<32x8x1xf32>
    %24 = arith.divf %20, %23 : vector<32x8x1xf32>
    %25 = vector.broadcast %24 : vector<32x8x1xf32> to vector<32x8x32xf32>
    %26 = arith.mulf %25, %0 : vector<32x8x32xf32>
    %cst_11 = arith.constant dense<0.000000e+00> : vector<32x32xf32>
    %27 = vector.multi_reduction <add>, %26, %cst_11 [1] : vector<32x8x32xf32> to vector<32x32xf32>
    %c0_12 = arith.constant 0 : index
    %c0_13 = arith.constant 0 : index
    %28 = vector.load %arg5[%c0_12, %c0_13] : memref<32x32xf32, #tpu.memory_space<vmem>>, vector<32x32xf32>
    %cst_14 = arith.constant dense<0.000000e+00> : vector<32x32xf32>
    %29 = tpu.matmul %27, %28, %cst_14 {dimension_numbers = #tpu.dot_dimension_numbers<[1], [0], [0], [1], [0, 0, 1, 1], [], []>} : vector<32x32xf32>, vector<32x32xf32>, vector<32x32xf32> -> vector<32x32xf32>
    %c0_15 = arith.constant 0 : index
    %c0_16 = arith.constant 0 : index
    %30 = vector.load %arg6[%c0_15, %c0_16] : memref<1x32xf32, #tpu.memory_space<vmem>>, vector<1x32xf32>
    %31 = vector.broadcast %30 : vector<1x32xf32> to vector<32x32xf32>
    %32 = arith.addf %29, %31 : vector<32x32xf32>
    %cst_17 = arith.constant 0.000000e+00 : f32
    %33 = vector.broadcast %cst_17 : f32 to vector<32x32xf32>
    %34 = arith.maximumf %32, %33 : vector<32x32xf32>
    %c0_18 = arith.constant 0 : index
    %c0_19 = arith.constant 0 : index
    %35 = vector.load %arg7[%c0_18, %c0_19] : memref<32x32xf32, #tpu.memory_space<vmem>>, vector<32x32xf32>
    tpu.vector_store %arg7[%c0_18, %c0_19], %34 {strides = array<i32>} : memref<32x32xf32, #tpu.memory_space<vmem>>, vector<32x32xf32>,
    return
  }
  func.func @transform_0(%arg0: i32) -> (i32, i32, i32) {
    %c0_i32 = arith.constant 0 : i32
    %c0_i32_0 = arith.constant 0 : i32
    %c0_i32_1 = arith.constant 0 : i32
    return %arg0, %c0_i32, %c0_i32_0 : i32, i32, i32
  }
  func.func @transform_1(%arg0: i32) -> (i32, i32) {
    %c0_i32 = arith.constant 0 : i32
    %c0_i32_0 = arith.constant 0 : i32
    %c0_i32_1 = arith.constant 0 : i32
    return %c0_i32, %c0_i32_0 : i32, i32
  }
  func.func @transform_2(%arg0: i32) -> (i32, i32) {
    %c0_i32 = arith.constant 0 : i32
    %c0_i32_0 = arith.constant 0 : i32
    %c0_i32_1 = arith.constant 0 : i32
    return %c0_i32, %c0_i32_0 : i32, i32
  }
  func.func @transform_3(%arg0: i32) -> (i32, i32) {
    %c0_i32 = arith.constant 0 : i32
    %c0_i32_0 = arith.constant 0 : i32
    %c0_i32_1 = arith.constant 0 : i32
    return %c0_i32, %c0_i32_0 : i32, i32
  }
  func.func @transform_4(%arg0: i32) -> (i32, i32) {
    %c0_i32 = arith.constant 0 : i32
    %c0_i32_0 = arith.constant 0 : i32
    %c0_i32_1 = arith.constant 0 : i32
    return %c0_i32, %c0_i32_0 : i32, i32
  }
  func.func @transform_5(%arg0: i32) -> (i32, i32) {
    %c0_i32 = arith.constant 0 : i32
    %c0_i32_0 = arith.constant 0 : i32
    %c0_i32_1 = arith.constant 0 : i32
    return %c0_i32, %c0_i32_0 : i32, i32
  }
  func.func @transform_6(%arg0: i32) -> (i32, i32) {
    %c0_i32 = arith.constant 0 : i32
    %c0_i32_0 = arith.constant 0 : i32
    return %arg0, %c0_i32 : i32, i32
  }
}

</mosaic_0001>

<llo_original>
// kernel: attention_forward.1
$region0: #{attention_forward.1}
  #allocation0 [shape = 'u32[]', space=smem, size = 0x4, offset = 0x4, fixed_abs, tag = 'smem constant byte address 0x4 - core index']
  #allocation1 [shape = 'u32[72,128]{1,0:T(1,128)}', space=vmem, size = 0x9000, scoped, tag = 'internal scratch']
  %s0 = inlined_call_operand.vmem [shape: f32[32,8,32], index: 0, kind: input, shape index: {}]
  %s1 = inlined_call_operand.vmem [shape: f32[32,32], index: 1, kind: input, shape index: {}]
  %s2 = inlined_call_operand.vmem [shape: f32[1,32], index: 2, kind: input, shape index: {}]
  %s3 = inlined_call_operand.vmem [shape: f32[1,32], index: 3, kind: input, shape index: {}]
  %s4 = inlined_call_operand.vmem [shape: f32[32,32], index: 4, kind: input, shape index: {}]
  %s5 = inlined_call_operand.vmem [shape: f32[1,32], index: 5, kind: input, shape index: {}]
  %s6 = inlined_call_operand.vmem [shape: f32[32,32], index: 6, kind: output, shape index: {}]
  %s7 = sld [smem:[#allocation0]]
  $region34: #{attention_forward.1} parent=0
    _
  %s9 = ssub.s32 1, %s7
  %s10 = scalar_select 0, %s9, %s7
  // Predicated region
  $region2: #{attention_forward.1} parent=0 // pred_check
    _
  $region3: #{attention_forward.1} parent=0 // pred_check_branch
    %12 = sbr.rel (0) target = $region5
  $region4: #{attention_forward.1} parent=0 // pred_region
    _
  $region5: #{attention_forward.1} parent=0 // pred_fallthru
    _
  // Predicated region
  $region6: #{attention_forward.1} parent=0 // pred_check
    _
  $region7: #{attention_forward.1} parent=0 // pred_check_branch
    %14 = sbr.rel (0) target = $region9
  $region8: #{attention_forward.1} parent=0 // pred_region
    _
  $region9: #{attention_forward.1} parent=0 // pred_fallthru
    _
  // Predicated region
  $region10: #{attention_forward.1} parent=0 // pred_check
    _
  $region11: #{attention_forward.1} parent=0 // pred_check_branch
    %16 = sbr.rel (0) target = $region13
  $region12: #{attention_forward.1} parent=0 // pred_region
    _
  $region13: #{attention_forward.1} parent=0 // pred_fallthru
    _
  // Predicated region
  $region14: #{attention_forward.1} parent=0 // pred_check
    _
  $region15: #{attention_forward.1} parent=0 // pred_check_branch
    %18 = sbr.rel (0) target = $region17
  $region16: #{attention_forward.1} parent=0 // pred_region
    _
  $region17: #{attention_forward.1} parent=0 // pred_fallthru
    _
  // Predicated region
  $region18: #{attention_forward.1} parent=0 // pred_check
    _
  $region19: #{attention_forward.1} parent=0 // pred_check_branch
    %20 = sbr.rel (0) target = $region21
  $region20: #{attention_forward.1} parent=0 // pred_region
    _
  $region21: #{attention_forward.1} parent=0 // pred_fallthru
    _
  // Predicated region
  $region22: #{attention_forward.1} parent=0 // pred_check
    _
  $region23: #{attention_forward.1} parent=0 // pred_check_branch
    %22 = sbr.rel (0) target = $region25
  $region24: #{attention_forward.1} parent=0 // pred_region
    _
  $region25: #{attention_forward.1} parent=0 // pred_fallthru
    _
  %v23 = vld [vmem:[%s0] sm:$0xff]
  %v24 = vld [vmem:[%s0 + $0x8] sm:$0xff]
  %v25 = vld [vmem:[%s0 + $0x10] sm:$0xff]
  %v26 = vld [vmem:[%s0 + $0x18] sm:$0xff]
  %v27 = vld [vmem:[%s0 + $0x20] sm:$0xff]
  %v28 = vld [vmem:[%s0 + $0x28] sm:$0xff]
  %v29 = vld [vmem:[%s0 + $0x30] sm:$0xff]
  %v30 = vld [vmem:[%s0 + $0x38] sm:$0xff]
  %v31 = vld [vmem:[%s0 + $0x40] sm:$0xff]
  %v32 = vld [vmem:[%s0 + $0x48] sm:$0xff]
  %v33 = vld [vmem:[%s0 + $0x50] sm:$0xff]
  %v34 = vld [vmem:[%s0 + $0x58] sm:$0xff]
  %v35 = vld [vmem:[%s0 + $0x60] sm:$0xff]
  %v36 = vld [vmem:[%s0 + $0x68] sm:$0xff]
  %v37 = vld [vmem:[%s0 + $0x70] sm:$0xff]
  %v38 = vld [vmem:[%s0 + $0x78] sm:$0xff]
  %v39 = vld [vmem:[%s0 + $0x80] sm:$0xff]
  %v40 = vld [vmem:[%s0 + $0x88] sm:$0xff]
  %v41 = vld [vmem:[%s0 + $0x90] sm:$0xff]
  %v42 = vld [vmem:[%s0 + $0x98] sm:$0xff]
  %v43 = vld [vmem:[%s0 + $0xa0] sm:$0xff]
  %v44 = vld [vmem:[%s0 + $0xa8] sm:$0xff]
  %v45 = vld [vmem:[%s0 + $0xb0] sm:$0xff]
  %v46 = vld [vmem:[%s0 + $0xb8] sm:$0xff]
  %v47 = vld [vmem:[%s0 + $0xc0] sm:$0xff]
  %v48 = vld [vmem:[%s0 + $0xc8] sm:$0xff]
  %v49 = vld [vmem:[%s0 + $0xd0] sm:$0xff]
  %v50 = vld [vmem:[%s0 + $0xd8] sm:$0xff]
  %v51 = vld [vmem:[%s0 + $0xe0] sm:$0xff]
  %v52 = vld [vmem:[%s0 + $0xe8] sm:$0xff]
  %v53 = vld [vmem:[%s0 + $0xf0] sm:$0xff]
  %v54 = vld [vmem:[%s0 + $0xf8] sm:$0xff]
  %v55 = vld [vmem:[%s1] sm:$0xff]
  %v56 = vld [vmem:[%s1 + $0x8] sm:$0xff]
  %v57 = vld [vmem:[%s1 + $0x10] sm:$0xff]
  %v58 = vld [vmem:[%s1 + $0x18] sm:$0xff]
  %v59 = vld [vmem:[%s2] sm:$0x1]
  %v61 = vperm.slane %v59, 0
  %vm63 = vcmask 261120
  %v65 = vsel %vm63, %v23, 0
  %v68 = vsel %vm63, %v24, 0
  %v71 = vsel %vm63, %v25, 0
  %v74 = vsel %vm63, %v26, 0
  %v77 = vsel %vm63, %v27, 0
  %v80 = vsel %vm63, %v28, 0
  %v83 = vsel %vm63, %v29, 0
  %v86 = vsel %vm63, %v30, 0
  %v89 = vsel %vm63, %v31, 0
  %v92 = vsel %vm63, %v32, 0
  %v95 = vsel %vm63, %v33, 0
  %v98 = vsel %vm63, %v34, 0
  %v101 = vsel %vm63, %v35, 0
  %v104 = vsel %vm63, %v36, 0
  %v107 = vsel %vm63, %v37, 0
  %v110 = vsel %vm63, %v38, 0
  %v113 = vsel %vm63, %v39, 0
  %v116 = vsel %vm63, %v40, 0
  %v119 = vsel %vm63, %v41, 0
  %v122 = vsel %vm63, %v42, 0
  %v125 = vsel %vm63, %v43, 0
  %v128 = vsel %vm63, %v44, 0
  %v131 = vsel %vm63, %v45, 0
  %v134 = vsel %vm63, %v46, 0
  %v137 = vsel %vm63, %v47, 0
  %v140 = vsel %vm63, %v48, 0
  %v143 = vsel %vm63, %v49, 0
  %v146 = vsel %vm63, %v50, 0
  %v149 = vsel %vm63, %v51, 0
  %v152 = vsel %vm63, %v52, 0
  %v155 = vsel %vm63, %v53, 0
  %v158 = vsel %vm63, %v54, 0
  %160 = vmatpush.msra.mxu0 0.0
  %161 = vmatpush.msra.mxu0 0.0
  %162 = vmatpush.msra.mxu0 0.0
  %163 = vmatpush.msra.mxu0 0.0
  %164 = vmatpush.msra.mxu0 0.0
  %165 = vmatpush.msra.mxu0 0.0
  %166 = vmatpush.msra.mxu0 0.0
  %167 = vmatpush.msra.mxu0 0.0
  %168 = vmatpush.msra.mxu0 0.0
  %169 = vmatpush.msra.mxu0 0.0
  %170 = vmatpush.msra.mxu0 0.0
  %171 = vmatpush.msra.mxu0 0.0
  %172 = vmatpush.msra.mxu0 %v58
  %173 = vmatpush.msra.mxu0 %v57
  %174 = vmatpush.msra.mxu0 %v56
  %175 = vmatpush.msra.mxu0 %v55
  %176 = vmatmul.f32.gmra.mxu0 %v65
  %v177 = vpop.f32.mrf.mxu0
  %v178 = vadd.f32 %v61, %v177
  %179 = vmatmul.f32.gmra.mxu0 %v68
  %v180 = vpop.f32.mrf.mxu0
  %v181 = vadd.f32 %v61, %v180
  %182 = vmatmul.f32.gmra.mxu0 %v71
  %v183 = vpop.f32.mrf.mxu0
  %v184 = vadd.f32 %v61, %v183
  %185 = vmatmul.f32.gmra.mxu0 %v74
  %v186 = vpop.f32.mrf.mxu0
  %v187 = vadd.f32 %v61, %v186
  %188 = vmatmul.f32.gmra.mxu0 %v77
  %v189 = vpop.f32.mrf.mxu0
  %v190 = vadd.f32 %v61, %v189
  %191 = vmatmul.f32.gmra.mxu0 %v80
  %v192 = vpop.f32.mrf.mxu0
  %v193 = vadd.f32 %v61, %v192
  %194 = vmatmul.f32.gmra.mxu0 %v83
  %v195 = vpop.f32.mrf.mxu0
  %v196 = vadd.f32 %v61, %v195
  %197 = vmatmul.f32.gmra.mxu0 %v86
  %v198 = vpop.f32.mrf.mxu0
  %v199 = vadd.f32 %v61, %v198
  %200 = vmatmul.f32.gmra.mxu0 %v89
  %v201 = vpop.f32.mrf.mxu0
  %v202 = vadd.f32 %v61, %v201
  %203 = vmatmul.f32.gmra.mxu0 %v92
  %v204 = vpop.f32.mrf.mxu0
  %v205 = vadd.f32 %v61, %v204
  %206 = vmatmul.f32.gmra.mxu0 %v95
  %v207 = vpop.f32.mrf.mxu0
  %v208 = vadd.f32 %v61, %v207
  %209 = vmatmul.f32.gmra.mxu0 %v98
  %v210 = vpop.f32.mrf.mxu0
  %v211 = vadd.f32 %v61, %v210
  %212 = vmatmul.f32.gmra.mxu0 %v101
  %v213 = vpop.f32.mrf.mxu0
  %v214 = vadd.f32 %v61, %v213
  %215 = vmatmul.f32.gmra.mxu0 %v104
  %v216 = vpop.f32.mrf.mxu0
  %v217 = vadd.f32 %v61, %v216
  %218 = vmatmul.f32.gmra.mxu0 %v107
  %v219 = vpop.f32.mrf.mxu0
  %v220 = vadd.f32 %v61, %v219
  %221 = vmatmul.f32.gmra.mxu0 %v110
  %v222 = vpop.f32.mrf.mxu0
  %v223 = vadd.f32 %v61, %v222
  %224 = vmatmul.f32.gmra.mxu0 %v113
  %v225 = vpop.f32.mrf.mxu0
  %v226 = vadd.f32 %v61, %v225
  %227 = vmatmul.f32.gmra.mxu0 %v116
  %v228 = vpop.f32.mrf.mxu0
  %v229 = vadd.f32 %v61, %v228
  %230 = vmatmul.f32.gmra.mxu0 %v119
  %v231 = vpop.f32.mrf.mxu0
  %v232 = vadd.f32 %v61, %v231
  %233 = vmatmul.f32.gmra.mxu0 %v122
  %v234 = vpop.f32.mrf.mxu0
  %v235 = vadd.f32 %v61, %v234
  %236 = vmatmul.f32.gmra.mxu0 %v125
  %v237 = vpop.f32.mrf.mxu0
  %v238 = vadd.f32 %v61, %v237
  %239 = vmatmul.f32.gmra.mxu0 %v128
  %v240 = vpop.f32.mrf.mxu0
  %v241 = vadd.f32 %v61, %v240
  %242 = vmatmul.f32.gmra.mxu0 %v131
  %v243 = vpop.f32.mrf.mxu0
  %v244 = vadd.f32 %v61, %v243
  %245 = vmatmul.f32.gmra.mxu0 %v134
  %v246 = vpop.f32.mrf.mxu0
  %v247 = vadd.f32 %v61, %v246
  %248 = vmatmul.f32.gmra.mxu0 %v137
  %v249 = vpop.f32.mrf.mxu0
  %v250 = vadd.f32 %v61, %v249
  %251 = vmatmul.f32.gmra.mxu0 %v140
  %v252 = vpop.f32.mrf.mxu0
  %v253 = vadd.f32 %v61, %v252
  %254 = vmatmul.f32.gmra.mxu0 %v143
  %v255 = vpop.f32.mrf.mxu0
  %v256 = vadd.f32 %v61, %v255
  %257 = vmatmul.f32.gmra.mxu0 %v146
  %v258 = vpop.f32.mrf.mxu0
  %v259 = vadd.f32 %v61, %v258
  %260 = vmatmul.f32.gmra.mxu0 %v149
  %v261 = vpop.f32.mrf.mxu0
  %v262 = vadd.f32 %v61, %v261
  %263 = vmatmul.f32.gmra.mxu0 %v152
  %v264 = vpop.f32.mrf.mxu0
  %v265 = vadd.f32 %v61, %v264
  %266 = vmatmul.f32.gmra.mxu0 %v155
  %v267 = vpop.f32.mrf.mxu0
  %v268 = vadd.f32 %v61, %v267
  %269 = vmatmul.f32.gmra.mxu0 %v158
  %v270 = vpop.f32.mrf.mxu0
  %v271 = vadd.f32 %v61, %v270
  %272 = vdwg.mxu0
  %v273 = vtanh.pop %v178
  %v274 = vtanh.pop %v181
  %v275 = vtanh.pop %v184
  %v276 = vtanh.pop %v187
  %v277 = vtanh.pop %v190
  %v278 = vtanh.pop %v193
  %v279 = vtanh.pop %v196
  %v280 = vtanh.pop %v199
  %v281 = vtanh.pop %v202
  %v282 = vtanh.pop %v205
  %v283 = vtanh.pop %v208
  %v284 = vtanh.pop %v211
  %v285 = vtanh.pop %v214
  %v286 = vtanh.pop %v217
  %v287 = vtanh.pop %v220
  %v288 = vtanh.pop %v223
  %v289 = vtanh.pop %v226
  %v290 = vtanh.pop %v229
  %v291 = vtanh.pop %v232
  %v292 = vtanh.pop %v235
  %v293 = vtanh.pop %v238
  %v294 = vtanh.pop %v241
  %v295 = vtanh.pop %v244
  %v296 = vtanh.pop %v247
  %v297 = vtanh.pop %v250
  %v298 = vtanh.pop %v253
  %v299 = vtanh.pop %v256
  %v300 = vtanh.pop %v259
  %v301 = vtanh.pop %v262
  %v302 = vtanh.pop %v265
  %v303 = vtanh.pop %v268
  %v304 = vtanh.pop %v271
  %v305 = vld [vmem:[%s3] sm:$0x1]
  %v307 = vperm.slane %v305, 0
  %v309 = vmul.f32 %v273, %v307
  %v310 = vmul.f32 %v274, %v307
  %v311 = vmul.f32 %v275, %v307
  %v312 = vmul.f32 %v276, %v307
  %v313 = vmul.f32 %v277, %v307
  %v314 = vmul.f32 %v278, %v307
  %v315 = vmul.f32 %v279, %v307
  %v316 = vmul.f32 %v280, %v307
  %v317 = vmul.f32 %v281, %v307
  %v318 = vmul.f32 %v282, %v307
  %v319 = vmul.f32 %v283, %v307
  %v320 = vmul.f32 %v284, %v307
  %v321 = vmul.f32 %v285, %v307
  %v322 = vmul.f32 %v286, %v307
  %v323 = vmul.f32 %v287, %v307
  %v324 = vmul.f32 %v288, %v307
  %v325 = vmul.f32 %v289, %v307
  %v326 = vmul.f32 %v290, %v307
  %v327 = vmul.f32 %v291, %v307
  %v328 = vmul.f32 %v292, %v307
  %v329 = vmul.f32 %v293, %v307
  %v330 = vmul.f32 %v294, %v307
  %v331 = vmul.f32 %v295, %v307
  %v332 = vmul.f32 %v296, %v307
  %v333 = vmul.f32 %v297, %v307
  %v334 = vmul.f32 %v298, %v307
  %v335 = vmul.f32 %v299, %v307
  %v336 = vmul.f32 %v300, %v307
  %v337 = vmul.f32 %v301, %v307
  %v338 = vmul.f32 %v302, %v307
  %v339 = vmul.f32 %v303, %v307
  %v340 = vmul.f32 %v304, %v307
  %v341 = vsel %vm63, %v309, 0.0
  %342 = vadd.xlane.f32.xlu0 %v341
  %v343 = vpop.xlane.xlu0 %342
  %v344 = vsel %vm63, %v310, 0.0
  %345 = vadd.xlane.f32.xlu0 %v344
  %v346 = vpop.xlane.xlu0 %345
  %v347 = vsel %vm63, %v311, 0.0
  %348 = vadd.xlane.f32.xlu0 %v347
  %v349 = vpop.xlane.xlu0 %348
  %v350 = vsel %vm63, %v312, 0.0
  %351 = vadd.xlane.f32.xlu0 %v350
  %v352 = vpop.xlane.xlu0 %351
  %v353 = vsel %vm63, %v313, 0.0
  %354 = vadd.xlane.f32.xlu0 %v353
  %v355 = vpop.xlane.xlu0 %354
  %v356 = vsel %vm63, %v314, 0.0
  %357 = vadd.xlane.f32.xlu0 %v356
  %v358 = vpop.xlane.xlu0 %357
  %v359 = vsel %vm63, %v315, 0.0
  %360 = vadd.xlane.f32.xlu0 %v359
  %v361 = vpop.xlane.xlu0 %360
  %v362 = vsel %vm63, %v316, 0.0
  %363 = vadd.xlane.f32.xlu0 %v362
  %v364 = vpop.xlane.xlu0 %363
  %v365 = vsel %vm63, %v317, 0.0
  %366 = vadd.xlane.f32.xlu0 %v365
  %v367 = vpop.xlane.xlu0 %366
  %v368 = vsel %vm63, %v318, 0.0
  %369 = vadd.xlane.f32.xlu0 %v368
  %v370 = vpop.xlane.xlu0 %369
  %v371 = vsel %vm63, %v319, 0.0
  %372 = vadd.xlane.f32.xlu0 %v371
  %v373 = vpop.xlane.xlu0 %372
  %v374 = vsel %vm63, %v320, 0.0
  %375 = vadd.xlane.f32.xlu0 %v374
  %v376 = vpop.xlane.xlu0 %375
  %v377 = vsel %vm63, %v321, 0.0
  %378 = vadd.xlane.f32.xlu0 %v377
  %v379 = vpop.xlane.xlu0 %378
  %v380 = vsel %vm63, %v322, 0.0
  %381 = vadd.xlane.f32.xlu0 %v380
  %v382 = vpop.xlane.xlu0 %381
  %v383 = vsel %vm63, %v323, 0.0
  %384 = vadd.xlane.f32.xlu0 %v383
  %v385 = vpop.xlane.xlu0 %384
  %v386 = vsel %vm63, %v324, 0.0
  %387 = vadd.xlane.f32.xlu0 %v386
  %v388 = vpop.xlane.xlu0 %387
  %v389 = vsel %vm63, %v325, 0.0
  %390 = vadd.xlane.f32.xlu0 %v389
  %v391 = vpop.xlane.xlu0 %390
  %v392 = vsel %vm63, %v326, 0.0
  %393 = vadd.xlane.f32.xlu0 %v392
  %v394 = vpop.xlane.xlu0 %393
  %v395 = vsel %vm63, %v327, 0.0
  %396 = vadd.xlane.f32.xlu0 %v395
  %v397 = vpop.xlane.xlu0 %396
  %v398 = vsel %vm63, %v328, 0.0
  %399 = vadd.xlane.f32.xlu0 %v398
  %v400 = vpop.xlane.xlu0 %399
  %v401 = vsel %vm63, %v329, 0.0
  %402 = vadd.xlane.f32.xlu0 %v401
  %v403 = vpop.xlane.xlu0 %402
  %v404 = vsel %vm63, %v330, 0.0
  %405 = vadd.xlane.f32.xlu0 %v404
  %v406 = vpop.xlane.xlu0 %405
  %v407 = vsel %vm63, %v331, 0.0
  %408 = vadd.xlane.f32.xlu0 %v407
  %v409 = vpop.xlane.xlu0 %408
  %v410 = vsel %vm63, %v332, 0.0
  %411 = vadd.xlane.f32.xlu0 %v410
  %v412 = vpop.xlane.xlu0 %411
  %v413 = vsel %vm63, %v333, 0.0
  %414 = vadd.xlane.f32.xlu0 %v413
  %v415 = vpop.xlane.xlu0 %414
  %v416 = vsel %vm63, %v334, 0.0
  %417 = vadd.xlane.f32.xlu0 %v416
  %v418 = vpop.xlane.xlu0 %417
  %v419 = vsel %vm63, %v335, 0.0
  %420 = vadd.xlane.f32.xlu0 %v419
  %v421 = vpop.xlane.xlu0 %420
  %v422 = vsel %vm63, %v336, 0.0
  %423 = vadd.xlane.f32.xlu0 %v422
  %v424 = vpop.xlane.xlu0 %423
  %v425 = vsel %vm63, %v337, 0.0
  %426 = vadd.xlane.f32.xlu0 %v425
  %v427 = vpop.xlane.xlu0 %426
  %v428 = vsel %vm63, %v338, 0.0
  %429 = vadd.xlane.f32.xlu0 %v428
  %v430 = vpop.xlane.xlu0 %429
  %v431 = vsel %vm63, %v339, 0.0
  %432 = vadd.xlane.f32.xlu0 %v431
  %v433 = vpop.xlane.xlu0 %432
  %v434 = vsel %vm63, %v340, 0.0
  %435 = vadd.xlane.f32.xlu0 %v434
  %v436 = vpop.xlane.xlu0 %435
  %v437 = vtanh.pop %v343
  %v438 = vtanh.pop %v346
  %v439 = vtanh.pop %v349
  %v440 = vtanh.pop %v352
  %v441 = vtanh.pop %v355
  %v442 = vtanh.pop %v358
  %v443 = vtanh.pop %v361
  %v444 = vtanh.pop %v364
  %v445 = vtanh.pop %v367
  %v446 = vtanh.pop %v370
  %v447 = vtanh.pop %v373
  %v448 = vtanh.pop %v376
  %v449 = vtanh.pop %v379
  %v450 = vtanh.pop %v382
  %v451 = vtanh.pop %v385
  %v452 = vtanh.pop %v388
  %v453 = vtanh.pop %v391
  %v454 = vtanh.pop %v394
  %v455 = vtanh.pop %v397
  %v456 = vtanh.pop %v400
  %v457 = vtanh.pop %v403
  %v458 = vtanh.pop %v406
  %v459 = vtanh.pop %v409
  %v460 = vtanh.pop %v412
  %v461 = vtanh.pop %v415
  %v462 = vtanh.pop %v418
  %v463 = vtanh.pop %v421
  %v464 = vtanh.pop %v424
  %v465 = vtanh.pop %v427
  %v466 = vtanh.pop %v430
  %v467 = vtanh.pop %v433
  %v468 = vtanh.pop %v436
  %v469 = vrot.slane %v437, 4
  %v470 = vmax.f32 %v437, %v469
  %v471 = vrot.slane %v470, 2
  %v472 = vmax.f32 %v470, %v471
  %v473 = vrot.slane %v472, 1
  %v474 = vmax.f32 %v472, %v473
  %v475 = vrot.slane %v438, 4
  %v476 = vmax.f32 %v438, %v475
  %v477 = vrot.slane %v476, 2
  %v478 = vmax.f32 %v476, %v477
  %v479 = vrot.slane %v478, 1
  %v480 = vmax.f32 %v478, %v479
  %v481 = vrot.slane %v439, 4
  %v482 = vmax.f32 %v439, %v481
  %v483 = vrot.slane %v482, 2
  %v484 = vmax.f32 %v482, %v483
  %v485 = vrot.slane %v484, 1
  %v486 = vmax.f32 %v484, %v485
  %v487 = vrot.slane %v440, 4
  %v488 = vmax.f32 %v440, %v487
  %v489 = vrot.slane %v488, 2
  %v490 = vmax.f32 %v488, %v489
  %v491 = vrot.slane %v490, 1
  %v492 = vmax.f32 %v490, %v491
  %v493 = vrot.slane %v441, 4
  %v494 = vmax.f32 %v441, %v493
  %v495 = vrot.slane %v494, 2
  %v496 = vmax.f32 %v494, %v495
  %v497 = vrot.slane %v496, 1
  %v498 = vmax.f32 %v496, %v497
  %v499 = vrot.slane %v442, 4
  %v500 = vmax.f32 %v442, %v499
  %v501 = vrot.slane %v500, 2
  %v502 = vmax.f32 %v500, %v501
  %v503 = vrot.slane %v502, 1
  %v504 = vmax.f32 %v502, %v503
  %v505 = vrot.slane %v443, 4
  %v506 = vmax.f32 %v443, %v505
  %v507 = vrot.slane %v506, 2
  %v508 = vmax.f32 %v506, %v507
  %v509 = vrot.slane %v508, 1
  %v510 = vmax.f32 %v508, %v509
  %v511 = vrot.slane %v444, 4
  %v512 = vmax.f32 %v444, %v511
  %v513 = vrot.slane %v512, 2
  %v514 = vmax.f32 %v512, %v513
  %v515 = vrot.slane %v514, 1
  %v516 = vmax.f32 %v514, %v515
  %v517 = vrot.slane %v445, 4
  %v518 = vmax.f32 %v445, %v517
  %v519 = vrot.slane %v518, 2
  %v520 = vmax.f32 %v518, %v519
  %v521 = vrot.slane %v520, 1
  %v522 = vmax.f32 %v520, %v521
  %v523 = vrot.slane %v446, 4
  %v524 = vmax.f32 %v446, %v523
  %v525 = vrot.slane %v524, 2
  %v526 = vmax.f32 %v524, %v525
  %v527 = vrot.slane %v526, 1
  %v528 = vmax.f32 %v526, %v527
  %v529 = vrot.slane %v447, 4
  %v530 = vmax.f32 %v447, %v529
  %v531 = vrot.slane %v530, 2
  %v532 = vmax.f32 %v530, %v531
  %v533 = vrot.slane %v532, 1
  %v534 = vmax.f32 %v532, %v533
  %v535 = vrot.slane %v448, 4
  %v536 = vmax.f32 %v448, %v535
  %v537 = vrot.slane %v536, 2
  %v538 = vmax.f32 %v536, %v537
  %v539 = vrot.slane %v538, 1
  %v540 = vmax.f32 %v538, %v539
  %v541 = vrot.slane %v449, 4
  %v542 = vmax.f32 %v449, %v541
  %v543 = vrot.slane %v542, 2
  %v544 = vmax.f32 %v542, %v543
  %v545 = vrot.slane %v544, 1
  %v546 = vmax.f32 %v544, %v545
  %v547 = vrot.slane %v450, 4
  %v548 = vmax.f32 %v450, %v547
  %v549 = vrot.slane %v548, 2
  %v550 = vmax.f32 %v548, %v549
  %v551 = vrot.slane %v550, 1
  %v552 = vmax.f32 %v550, %v551
  %v553 = vrot.slane %v451, 4
  %v554 = vmax.f32 %v451, %v553
  %v555 = vrot.slane %v554, 2
  %v556 = vmax.f32 %v554, %v555
  %v557 = vrot.slane %v556, 1
  %v558 = vmax.f32 %v556, %v557
  %v559 = vrot.slane %v452, 4
  %v560 = vmax.f32 %v452, %v559
  %v561 = vrot.slane %v560, 2
  %v562 = vmax.f32 %v560, %v561
  %v563 = vrot.slane %v562, 1
  %v564 = vmax.f32 %v562, %v563
  %v565 = vrot.slane %v453, 4
  %v566 = vmax.f32 %v453, %v565
  %v567 = vrot.slane %v566, 2
  %v568 = vmax.f32 %v566, %v567
  %v569 = vrot.slane %v568, 1
  %v570 = vmax.f32 %v568, %v569
  %v571 = vrot.slane %v454, 4
  %v572 = vmax.f32 %v454, %v571
  %v573 = vrot.slane %v572, 2
  %v574 = vmax.f32 %v572, %v573
  %v575 = vrot.slane %v574, 1
  %v576 = vmax.f32 %v574, %v575
  %v577 = vrot.slane %v455, 4
  %v578 = vmax.f32 %v455, %v577
  %v579 = vrot.slane %v578, 2
  %v580 = vmax.f32 %v578, %v579
  %v581 = vrot.slane %v580, 1
  %v582 = vmax.f32 %v580, %v581
  %v583 = vrot.slane %v456, 4
  %v584 = vmax.f32 %v456, %v583
  %v585 = vrot.slane %v584, 2
  %v586 = vmax.f32 %v584, %v585
  %v587 = vrot.slane %v586, 1
  %v588 = vmax.f32 %v586, %v587
  %v589 = vrot.slane %v457, 4
  %v590 = vmax.f32 %v457, %v589
  %v591 = vrot.slane %v590, 2
  %v592 = vmax.f32 %v590, %v591
  %v593 = vrot.slane %v592, 1
  %v594 = vmax.f32 %v592, %v593
  %v595 = vrot.slane %v458, 4
  %v596 = vmax.f32 %v458, %v595
  %v597 = vrot.slane %v596, 2
  %v598 = vmax.f32 %v596, %v597
  %v599 = vrot.slane %v598, 1
  %v600 = vmax.f32 %v598, %v599
  %v601 = vrot.slane %v459, 4
  %v602 = vmax.f32 %v459, %v601
  %v603 = vrot.slane %v602, 2
  %v604 = vmax.f32 %v602, %v603
  %v605 = vrot.slane %v604, 1
  %v606 = vmax.f32 %v604, %v605
  %v607 = vrot.slane %v460, 4
  %v608 = vmax.f32 %v460, %v607
  %v609 = vrot.slane %v608, 2
  %v610 = vmax.f32 %v608, %v609
  %v611 = vrot.slane %v610, 1
  %v612 = vmax.f32 %v610, %v611
  %v613 = vrot.slane %v461, 4
  %v614 = vmax.f32 %v461, %v613
  %v615 = vrot.slane %v614, 2
  %v616 = vmax.f32 %v614, %v615
  %v617 = vrot.slane %v616, 1
  %v618 = vmax.f32 %v616, %v617
  %v619 = vrot.slane %v462, 4
  %v620 = vmax.f32 %v462, %v619
  %v621 = vrot.slane %v620, 2
  %v622 = vmax.f32 %v620, %v621
  %v623 = vrot.slane %v622, 1
  %v624 = vmax.f32 %v622, %v623
  %v625 = vrot.slane %v463, 4
  %v626 = vmax.f32 %v463, %v625
  %v627 = vrot.slane %v626, 2
  %v628 = vmax.f32 %v626, %v627
  %v629 = vrot.slane %v628, 1
  %v630 = vmax.f32 %v628, %v629
  %v631 = vrot.slane %v464, 4
  %v632 = vmax.f32 %v464, %v631
  %v633 = vrot.slane %v632, 2
  %v634 = vmax.f32 %v632, %v633
  %v635 = vrot.slane %v634, 1
  %v636 = vmax.f32 %v634, %v635
  %v637 = vrot.slane %v465, 4
  %v638 = vmax.f32 %v465, %v637
  %v639 = vrot.slane %v638, 2
  %v640 = vmax.f32 %v638, %v639
  %v641 = vrot.slane %v640, 1
  %v642 = vmax.f32 %v640, %v641
  %v643 = vrot.slane %v466, 4
  %v644 = vmax.f32 %v466, %v643
  %v645 = vrot.slane %v644, 2
  %v646 = vmax.f32 %v644, %v645
  %v647 = vrot.slane %v646, 1
  %v648 = vmax.f32 %v646, %v647
  %v649 = vrot.slane %v467, 4
  %v650 = vmax.f32 %v467, %v649
  %v651 = vrot.slane %v650, 2
  %v652 = vmax.f32 %v650, %v651
  %v653 = vrot.slane %v652, 1
  %v654 = vmax.f32 %v652, %v653
  %v655 = vrot.slane %v468, 4
  %v656 = vmax.f32 %v468, %v655
  %v657 = vrot.slane %v656, 2
  %v658 = vmax.f32 %v656, %v657
  %v659 = vrot.slane %v658, 1
  %v660 = vmax.f32 %v658, %v659
  %v661 = vsub.f32 %v437, %v474
  %v662 = vsub.f32 %v438, %v480
  %v663 = vsub.f32 %v439, %v486
  %v664 = vsub.f32 %v440, %v492
  %v665 = vsub.f32 %v441, %v498
  %v666 = vsub.f32 %v442, %v504
  %v667 = vsub.f32 %v443, %v510
  %v668 = vsub.f32 %v444, %v516
  %v669 = vsub.f32 %v445, %v522
  %v670 = vsub.f32 %v446, %v528
  %v671 = vsub.f32 %v447, %v534
  %v672 = vsub.f32 %v448, %v540
  %v673 = vsub.f32 %v449, %v546
  %v674 = vsub.f32 %v450, %v552
  %v675 = vsub.f32 %v451, %v558
  %v676 = vsub.f32 %v452, %v564
  %v677 = vsub.f32 %v453, %v570
  %v678 = vsub.f32 %v454, %v576
  %v679 = vsub.f32 %v455, %v582
  %v680 = vsub.f32 %v456, %v588
  %v681 = vsub.f32 %v457, %v594
  %v682 = vsub.f32 %v458, %v600
  %v683 = vsub.f32 %v459, %v606
  %v684 = vsub.f32 %v460, %v612
  %v685 = vsub.f32 %v461, %v618
  %v686 = vsub.f32 %v462, %v624
  %v687 = vsub.f32 %v463, %v630
  %v688 = vsub.f32 %v464, %v636
  %v689 = vsub.f32 %v465, %v642
  %v690 = vsub.f32 %v466, %v648
  %v691 = vsub.f32 %v467, %v654
  %v692 = vsub.f32 %v468, %v660
  %v693 = vmul.f32 %v661, 1.442695
  %v694 = vpow.pop %v693
  %v695 = vmul.f32 %v662, 1.442695
  %v696 = vpow.pop %v695
  %v697 = vmul.f32 %v663, 1.442695
  %v698 = vpow.pop %v697
  %v699 = vmul.f32 %v664, 1.442695
  %v700 = vpow.pop %v699
  %v701 = vmul.f32 %v665, 1.442695
  %v702 = vpow.pop %v701
  %v703 = vmul.f32 %v666, 1.442695
  %v704 = vpow.pop %v703
  %v705 = vmul.f32 %v667, 1.442695
  %v706 = vpow.pop %v705
  %v707 = vmul.f32 %v668, 1.442695
  %v708 = vpow.pop %v707
  %v709 = vmul.f32 %v669, 1.442695
  %v710 = vpow.pop %v709
  %v711 = vmul.f32 %v670, 1.442695
  %v712 = vpow.pop %v711
  %v713 = vmul.f32 %v671, 1.442695
  %v714 = vpow.pop %v713
  %v715 = vmul.f32 %v672, 1.442695
  %v716 = vpow.pop %v715
  %v717 = vmul.f32 %v673, 1.442695
  %v718 = vpow.pop %v717
  %v719 = vmul.f32 %v674, 1.442695
  %v720 = vpow.pop %v719
  %v721 = vmul.f32 %v675, 1.442695
  %v722 = vpow.pop %v721
  %v723 = vmul.f32 %v676, 1.442695
  %v724 = vpow.pop %v723
  %v725 = vmul.f32 %v677, 1.442695
  %v726 = vpow.pop %v725
  %v727 = vmul.f32 %v678, 1.442695
  %v728 = vpow.pop %v727
  %v729 = vmul.f32 %v679, 1.442695
  %v730 = vpow.pop %v729
  %v731 = vmul.f32 %v680, 1.442695
  %v732 = vpow.pop %v731
  %v733 = vmul.f32 %v681, 1.442695
  %v734 = vpow.pop %v733
  %v735 = vmul.f32 %v682, 1.442695
  %v736 = vpow.pop %v735
  %v737 = vmul.f32 %v683, 1.442695
  %v738 = vpow.pop %v737
  %v739 = vmul.f32 %v684, 1.442695
  %v740 = vpow.pop %v739
  %v741 = vmul.f32 %v685, 1.442695
  %v742 = vpow.pop %v741
  %v743 = vmul.f32 %v686, 1.442695
  %v744 = vpow.pop %v743
  %v745 = vmul.f32 %v687, 1.442695
  %v746 = vpow.pop %v745
  %v747 = vmul.f32 %v688, 1.442695
  %v748 = vpow.pop %v747
  %v749 = vmul.f32 %v689, 1.442695
  %v750 = vpow.pop %v749
  %v751 = vmul.f32 %v690, 1.442695
  %v752 = vpow.pop %v751
  %v753 = vmul.f32 %v691, 1.442695
  %v754 = vpow.pop %v753
  %v755 = vmul.f32 %v692, 1.442695
  %v756 = vpow.pop %v755
  %v757 = vrot.slane %v694, 4
  %v758 = vadd.f32 %v694, %v757
  %v759 = vrot.slane %v758, 2
  %v760 = vadd.f32 %v758, %v759
  %v761 = vrot.slane %v760, 1
  %v762 = vadd.f32 %v760, %v761
  %v763 = vrot.slane %v696, 4
  %v764 = vadd.f32 %v696, %v763
  %v765 = vrot.slane %v764, 2
  %v766 = vadd.f32 %v764, %v765
  %v767 = vrot.slane %v766, 1
  %v768 = vadd.f32 %v766, %v767
  %v769 = vrot.slane %v698, 4
  %v770 = vadd.f32 %v698, %v769
  %v771 = vrot.slane %v770, 2
  %v772 = vadd.f32 %v770, %v771
  %v773 = vrot.slane %v772, 1
  %v774 = vadd.f32 %v772, %v773
  %v775 = vrot.slane %v700, 4
  %v776 = vadd.f32 %v700, %v775
  %v777 = vrot.slane %v776, 2
  %v778 = vadd.f32 %v776, %v777
  %v779 = vrot.slane %v778, 1
  %v780 = vadd.f32 %v778, %v779
  %v781 = vrot.slane %v702, 4
  %v782 = vadd.f32 %v702, %v781
  %v783 = vrot.slane %v782, 2
  %v784 = vadd.f32 %v782, %v783
  %v785 = vrot.slane %v784, 1
  %v786 = vadd.f32 %v784, %v785
  %v787 = vrot.slane %v704, 4
  %v788 = vadd.f32 %v704, %v787
  %v789 = vrot.slane %v788, 2
  %v790 = vadd.f32 %v788, %v789
  %v791 = vrot.slane %v790, 1
  %v792 = vadd.f32 %v790, %v791
  %v793 = vrot.slane %v706, 4
  %v794 = vadd.f32 %v706, %v793
  %v795 = vrot.slane %v794, 2
  %v796 = vadd.f32 %v794, %v795
  %v797 = vrot.slane %v796, 1
  %v798 = vadd.f32 %v796, %v797
  %v799 = vrot.slane %v708, 4
  %v800 = vadd.f32 %v708, %v799
  %v801 = vrot.slane %v800, 2
  %v802 = vadd.f32 %v800, %v801
  %v803 = vrot.slane %v802, 1
  %v804 = vadd.f32 %v802, %v803
  %v805 = vrot.slane %v710, 4
  %v806 = vadd.f32 %v710, %v805
  %v807 = vrot.slane %v806, 2
  %v808 = vadd.f32 %v806, %v807
  %v809 = vrot.slane %v808, 1
  %v810 = vadd.f32 %v808, %v809
  %v811 = vrot.slane %v712, 4
  %v812 = vadd.f32 %v712, %v811
  %v813 = vrot.slane %v812, 2
  %v814 = vadd.f32 %v812, %v813
  %v815 = vrot.slane %v814, 1
  %v816 = vadd.f32 %v814, %v815
  %v817 = vrot.slane %v714, 4
  %v818 = vadd.f32 %v714, %v817
  %v819 = vrot.slane %v818, 2
  %v820 = vadd.f32 %v818, %v819
  %v821 = vrot.slane %v820, 1
  %v822 = vadd.f32 %v820, %v821
  %v823 = vrot.slane %v716, 4
  %v824 = vadd.f32 %v716, %v823
  %v825 = vrot.slane %v824, 2
  %v826 = vadd.f32 %v824, %v825
  %v827 = vrot.slane %v826, 1
  %v828 = vadd.f32 %v826, %v827
  %v829 = vrot.slane %v718, 4
  %v830 = vadd.f32 %v718, %v829
  %v831 = vrot.slane %v830, 2
  %v832 = vadd.f32 %v830, %v831
  %v833 = vrot.slane %v832, 1
  %v834 = vadd.f32 %v832, %v833
  %v835 = vrot.slane %v720, 4
  %v836 = vadd.f32 %v720, %v835
  %v837 = vrot.slane %v836, 2
  %v838 = vadd.f32 %v836, %v837
  %v839 = vrot.slane %v838, 1
  %v840 = vadd.f32 %v838, %v839
  %v841 = vrot.slane %v722, 4
  %v842 = vadd.f32 %v722, %v841
  %v843 = vrot.slane %v842, 2
  %v844 = vadd.f32 %v842, %v843
  %v845 = vrot.slane %v844, 1
  %v846 = vadd.f32 %v844, %v845
  %v847 = vrot.slane %v724, 4
  %v848 = vadd.f32 %v724, %v847
  %v849 = vrot.slane %v848, 2
  %v850 = vadd.f32 %v848, %v849
  %v851 = vrot.slane %v850, 1
  %v852 = vadd.f32 %v850, %v851
  %v853 = vrot.slane %v726, 4
  %v854 = vadd.f32 %v726, %v853
  %v855 = vrot.slane %v854, 2
  %v856 = vadd.f32 %v854, %v855
  %v857 = vrot.slane %v856, 1
  %v858 = vadd.f32 %v856, %v857
  %v859 = vrot.slane %v728, 4
  %v860 = vadd.f32 %v728, %v859
  %v861 = vrot.slane %v860, 2
  %v862 = vadd.f32 %v860, %v861
  %v863 = vrot.slane %v862, 1
  %v864 = vadd.f32 %v862, %v863
  %v865 = vrot.slane %v730, 4
  %v866 = vadd.f32 %v730, %v865
  %v867 = vrot.slane %v866, 2
  %v868 = vadd.f32 %v866, %v867
  %v869 = vrot.slane %v868, 1
  %v870 = vadd.f32 %v868, %v869
  %v871 = vrot.slane %v732, 4
  %v872 = vadd.f32 %v732, %v871
  %v873 = vrot.slane %v872, 2
  %v874 = vadd.f32 %v872, %v873
  %v875 = vrot.slane %v874, 1
  %v876 = vadd.f32 %v874, %v875
  %v877 = vrot.slane %v734, 4
  %v878 = vadd.f32 %v734, %v877
  %v879 = vrot.slane %v878, 2
  %v880 = vadd.f32 %v878, %v879
  %v881 = vrot.slane %v880, 1
  %v882 = vadd.f32 %v880, %v881
  %v883 = vrot.slane %v736, 4
  %v884 = vadd.f32 %v736, %v883
  %v885 = vrot.slane %v884, 2
  %v886 = vadd.f32 %v884, %v885
  %v887 = vrot.slane %v886, 1
  %v888 = vadd.f32 %v886, %v887
  %v889 = vrot.slane %v738, 4
  %v890 = vadd.f32 %v738, %v889
  %v891 = vrot.slane %v890, 2
  %v892 = vadd.f32 %v890, %v891
  %v893 = vrot.slane %v892, 1
  %v894 = vadd.f32 %v892, %v893
  %v895 = vrot.slane %v740, 4
  %v896 = vadd.f32 %v740, %v895
  %v897 = vrot.slane %v896, 2
  %v898 = vadd.f32 %v896, %v897
  %v899 = vrot.slane %v898, 1
  %v900 = vadd.f32 %v898, %v899
  %v901 = vrot.slane %v742, 4
  %v902 = vadd.f32 %v742, %v901
  %v903 = vrot.slane %v902, 2
  %v904 = vadd.f32 %v902, %v903
  %v905 = vrot.slane %v904, 1
  %v906 = vadd.f32 %v904, %v905
  %v907 = vrot.slane %v744, 4
  %v908 = vadd.f32 %v744, %v907
  %v909 = vrot.slane %v908, 2
  %v910 = vadd.f32 %v908, %v909
  %v911 = vrot.slane %v910, 1
  %v912 = vadd.f32 %v910, %v911
  %v913 = vrot.slane %v746, 4
  %v914 = vadd.f32 %v746, %v913
  %v915 = vrot.slane %v914, 2
  %v916 = vadd.f32 %v914, %v915
  %v917 = vrot.slane %v916, 1
  %v918 = vadd.f32 %v916, %v917
  %v919 = vrot.slane %v748, 4
  %v920 = vadd.f32 %v748, %v919
  %v921 = vrot.slane %v920, 2
  %v922 = vadd.f32 %v920, %v921
  %v923 = vrot.slane %v922, 1
  %v924 = vadd.f32 %v922, %v923
  %v925 = vrot.slane %v750, 4
  %v926 = vadd.f32 %v750, %v925
  %v927 = vrot.slane %v926, 2
  %v928 = vadd.f32 %v926, %v927
  %v929 = vrot.slane %v928, 1
  %v930 = vadd.f32 %v928, %v929
  %v931 = vrot.slane %v752, 4
  %v932 = vadd.f32 %v752, %v931
  %v933 = vrot.slane %v932, 2
  %v934 = vadd.f32 %v932, %v933
  %v935 = vrot.slane %v934, 1
  %v936 = vadd.f32 %v934, %v935
  %v937 = vrot.slane %v754, 4
  %v938 = vadd.f32 %v754, %v937
  %v939 = vrot.slane %v938, 2
  %v940 = vadd.f32 %v938, %v939
  %v941 = vrot.slane %v940, 1
  %v942 = vadd.f32 %v940, %v941
  %v943 = vrot.slane %v756, 4
  %v944 = vadd.f32 %v756, %v943
  %v945 = vrot.slane %v944, 2
  %v946 = vadd.f32 %v944, %v945
  %v947 = vrot.slane %v946, 1
  %v948 = vadd.f32 %v946, %v947
  %v949 = vrcp.pop %v762
  %v950 = vmul.f32 %v762, %v949
  %v951 = vsub.f32 1.0, %v950
  %v952 = vmul.f32 %v949, %v951
  %v953 = vadd.f32 %v949, %v952
  %vm954 = vweird.f32 %v762
  %vm955 = vweird.f32 %v949
  %vm956 = vmor %vm954, %vm955
  %v957 = vsel %vm956, %v949, %v953
  %v958 = vand.u32 2147483647, %v762
  %vm959 = vcmp.eq.f32.partialorder %v958, 8.507059e+37
  %v960 = vand.u32 %v762, 2147483648
  %v961 = vor.u32 1.1754944e-38, %v960
  %v962 = vsel %vm959, %v961, %v957
  %v963 = vmul.f32 %v694, %v962
  %v964 = vrcp.pop %v768
  %v965 = vmul.f32 %v768, %v964
  %v966 = vsub.f32 1.0, %v965
  %v967 = vmul.f32 %v964, %v966
  %v968 = vadd.f32 %v964, %v967
  %vm969 = vweird.f32 %v768
  %vm970 = vweird.f32 %v964
  %vm971 = vmor %vm969, %vm970
  %v972 = vsel %vm971, %v964, %v968
  %v973 = vand.u32 2147483647, %v768
  %vm974 = vcmp.eq.f32.partialorder %v973, 8.507059e+37
  %v975 = vand.u32 %v768, 2147483648
  %v976 = vor.u32 1.1754944e-38, %v975
  %v977 = vsel %vm974, %v976, %v972
  %v978 = vmul.f32 %v696, %v977
  %v979 = vrcp.pop %v774
  %v980 = vmul.f32 %v774, %v979
  %v981 = vsub.f32 1.0, %v980
  %v982 = vmul.f32 %v979, %v981
  %v983 = vadd.f32 %v979, %v982
  %vm984 = vweird.f32 %v774
  %vm985 = vweird.f32 %v979
  %vm986 = vmor %vm984, %vm985
  %v987 = vsel %vm986, %v979, %v983
  %v988 = vand.u32 2147483647, %v774
  %vm989 = vcmp.eq.f32.partialorder %v988, 8.507059e+37
  %v990 = vand.u32 %v774, 2147483648
  %v991 = vor.u32 1.1754944e-38, %v990
  %v992 = vsel %vm989, %v991, %v987
  %v993 = vmul.f32 %v698, %v992
  %v994 = vrcp.pop %v780
  %v995 = vmul.f32 %v780, %v994
  %v996 = vsub.f32 1.0, %v995
  %v997 = vmul.f32 %v994, %v996
  %v998 = vadd.f32 %v994, %v997
  %vm999 = vweird.f32 %v780
  %vm1000 = vweird.f32 %v994
  %vm1001 = vmor %vm999, %vm1000
  %v1002 = vsel %vm1001, %v994, %v998
  %v1003 = vand.u32 2147483647, %v780
  %vm1004 = vcmp.eq.f32.partialorder %v1003, 8.507059e+37
  %v1005 = vand.u32 %v780, 2147483648
  %v1006 = vor.u32 1.1754944e-38, %v1005
  %v1007 = vsel %vm1004, %v1006, %v1002
  %v1008 = vmul.f32 %v700, %v1007
  %v1009 = vrcp.pop %v786
  %v1010 = vmul.f32 %v786, %v1009
  %v1011 = vsub.f32 1.0, %v1010
  %v1012 = vmul.f32 %v1009, %v1011
  %v1013 = vadd.f32 %v1009, %v1012
  %vm1014 = vweird.f32 %v786
  %vm1015 = vweird.f32 %v1009
  %vm1016 = vmor %vm1014, %vm1015
  %v1017 = vsel %vm1016, %v1009, %v1013
  %v1018 = vand.u32 2147483647, %v786
  %vm1019 = vcmp.eq.f32.partialorder %v1018, 8.507059e+37
  %v1020 = vand.u32 %v786, 2147483648
  %v1021 = vor.u32 1.1754944e-38, %v1020
  %v1022 = vsel %vm1019, %v1021, %v1017
  %v1023 = vmul.f32 %v702, %v1022
  %v1024 = vrcp.pop %v792
  %v1025 = vmul.f32 %v792, %v1024
  %v1026 = vsub.f32 1.0, %v1025
  %v1027 = vmul.f32 %v1024, %v1026
  %v1028 = vadd.f32 %v1024, %v1027
  %vm1029 = vweird.f32 %v792
  %vm1030 = vweird.f32 %v1024
  %vm1031 = vmor %vm1029, %vm1030
  %v1032 = vsel %vm1031, %v1024, %v1028
  %v1033 = vand.u32 2147483647, %v792
  %vm1034 = vcmp.eq.f32.partialorder %v1033, 8.507059e+37
  %v1035 = vand.u32 %v792, 2147483648
  %v1036 = vor.u32 1.1754944e-38, %v1035
  %v1037 = vsel %vm1034, %v1036, %v1032
  %v1038 = vmul.f32 %v704, %v1037
  %v1039 = vrcp.pop %v798
  %v1040 = vmul.f32 %v798, %v1039
  %v1041 = vsub.f32 1.0, %v1040
  %v1042 = vmul.f32 %v1039, %v1041
  %v1043 = vadd.f32 %v1039, %v1042
  %vm1044 = vweird.f32 %v798
  %vm1045 = vweird.f32 %v1039
  %vm1046 = vmor %vm1044, %vm1045
  %v1047 = vsel %vm1046, %v1039, %v1043
  %v1048 = vand.u32 2147483647, %v798
  %vm1049 = vcmp.eq.f32.partialorder %v1048, 8.507059e+37
  %v1050 = vand.u32 %v798, 2147483648
  %v1051 = vor.u32 1.1754944e-38, %v1050
  %v1052 = vsel %vm1049, %v1051, %v1047
  %v1053 = vmul.f32 %v706, %v1052
  %v1054 = vrcp.pop %v804
  %v1055 = vmul.f32 %v804, %v1054
  %v1056 = vsub.f32 1.0, %v1055
  %v1057 = vmul.f32 %v1054, %v1056
  %v1058 = vadd.f32 %v1054, %v1057
  %vm1059 = vweird.f32 %v804
  %vm1060 = vweird.f32 %v1054
  %vm1061 = vmor %vm1059, %vm1060
  %v1062 = vsel %vm1061, %v1054, %v1058
  %v1063 = vand.u32 2147483647, %v804
  %vm1064 = vcmp.eq.f32.partialorder %v1063, 8.507059e+37
  %v1065 = vand.u32 %v804, 2147483648
  %v1066 = vor.u32 1.1754944e-38, %v1065
  %v1067 = vsel %vm1064, %v1066, %v1062
  %v1068 = vmul.f32 %v708, %v1067
  %v1069 = vrcp.pop %v810
  %v1070 = vmul.f32 %v810, %v1069
  %v1071 = vsub.f32 1.0, %v1070
  %v1072 = vmul.f32 %v1069, %v1071
  %v1073 = vadd.f32 %v1069, %v1072
  %vm1074 = vweird.f32 %v810
  %vm1075 = vweird.f32 %v1069
  %vm1076 = vmor %vm1074, %vm1075
  %v1077 = vsel %vm1076, %v1069, %v1073
  %v1078 = vand.u32 2147483647, %v810
  %vm1079 = vcmp.eq.f32.partialorder %v1078, 8.507059e+37
  %v1080 = vand.u32 %v810, 2147483648
  %v1081 = vor.u32 1.1754944e-38, %v1080
  %v1082 = vsel %vm1079, %v1081, %v1077
  %v1083 = vmul.f32 %v710, %v1082
  %v1084 = vrcp.pop %v816
  %v1085 = vmul.f32 %v816, %v1084
  %v1086 = vsub.f32 1.0, %v1085
  %v1087 = vmul.f32 %v1084, %v1086
  %v1088 = vadd.f32 %v1084, %v1087
  %vm1089 = vweird.f32 %v816
  %vm1090 = vweird.f32 %v1084
  %vm1091 = vmor %vm1089, %vm1090
  %v1092 = vsel %vm1091, %v1084, %v1088
  %v1093 = vand.u32 2147483647, %v816
  %vm1094 = vcmp.eq.f32.partialorder %v1093, 8.507059e+37
  %v1095 = vand.u32 %v816, 2147483648
  %v1096 = vor.u32 1.1754944e-38, %v1095
  %v1097 = vsel %vm1094, %v1096, %v1092
  %v1098 = vmul.f32 %v712, %v1097
  %v1099 = vrcp.pop %v822
  %v1100 = vmul.f32 %v822, %v1099
  %v1101 = vsub.f32 1.0, %v1100
  %v1102 = vmul.f32 %v1099, %v1101
  %v1103 = vadd.f32 %v1099, %v1102
  %vm1104 = vweird.f32 %v822
  %vm1105 = vweird.f32 %v1099
  %vm1106 = vmor %vm1104, %vm1105
  %v1107 = vsel %vm1106, %v1099, %v1103
  %v1108 = vand.u32 2147483647, %v822
  %vm1109 = vcmp.eq.f32.partialorder %v1108, 8.507059e+37
  %v1110 = vand.u32 %v822, 2147483648
  %v1111 = vor.u32 1.1754944e-38, %v1110
  %v1112 = vsel %vm1109, %v1111, %v1107
  %v1113 = vmul.f32 %v714, %v1112
  %v1114 = vrcp.pop %v828
  %v1115 = vmul.f32 %v828, %v1114
  %v1116 = vsub.f32 1.0, %v1115
  %v1117 = vmul.f32 %v1114, %v1116
  %v1118 = vadd.f32 %v1114, %v1117
  %vm1119 = vweird.f32 %v828
  %vm1120 = vweird.f32 %v1114
  %vm1121 = vmor %vm1119, %vm1120
  %v1122 = vsel %vm1121, %v1114, %v1118
  %v1123 = vand.u32 2147483647, %v828
  %vm1124 = vcmp.eq.f32.partialorder %v1123, 8.507059e+37
  %v1125 = vand.u32 %v828, 2147483648
  %v1126 = vor.u32 1.1754944e-38, %v1125
  %v1127 = vsel %vm1124, %v1126, %v1122
  %v1128 = vmul.f32 %v716, %v1127
  %v1129 = vrcp.pop %v834
  %v1130 = vmul.f32 %v834, %v1129
  %v1131 = vsub.f32 1.0, %v1130
  %v1132 = vmul.f32 %v1129, %v1131
  %v1133 = vadd.f32 %v1129, %v1132
  %vm1134 = vweird.f32 %v834
  %vm1135 = vweird.f32 %v1129
  %vm1136 = vmor %vm1134, %vm1135
  %v1137 = vsel %vm1136, %v1129, %v1133
  %v1138 = vand.u32 2147483647, %v834
  %vm1139 = vcmp.eq.f32.partialorder %v1138, 8.507059e+37
  %v1140 = vand.u32 %v834, 2147483648
  %v1141 = vor.u32 1.1754944e-38, %v1140
  %v1142 = vsel %vm1139, %v1141, %v1137
  %v1143 = vmul.f32 %v718, %v1142
  %v1144 = vrcp.pop %v840
  %v1145 = vmul.f32 %v840, %v1144
  %v1146 = vsub.f32 1.0, %v1145
  %v1147 = vmul.f32 %v1144, %v1146
  %v1148 = vadd.f32 %v1144, %v1147
  %vm1149 = vweird.f32 %v840
  %vm1150 = vweird.f32 %v1144
  %vm1151 = vmor %vm1149, %vm1150
  %v1152 = vsel %vm1151, %v1144, %v1148
  %v1153 = vand.u32 2147483647, %v840
  %vm1154 = vcmp.eq.f32.partialorder %v1153, 8.507059e+37
  %v1155 = vand.u32 %v840, 2147483648
  %v1156 = vor.u32 1.1754944e-38, %v1155
  %v1157 = vsel %vm1154, %v1156, %v1152
  %v1158 = vmul.f32 %v720, %v1157
  %v1159 = vrcp.pop %v846
  %v1160 = vmul.f32 %v846, %v1159
  %v1161 = vsub.f32 1.0, %v1160
  %v1162 = vmul.f32 %v1159, %v1161
  %v1163 = vadd.f32 %v1159, %v1162
  %vm1164 = vweird.f32 %v846
  %vm1165 = vweird.f32 %v1159
  %vm1166 = vmor %vm1164, %vm1165
  %v1167 = vsel %vm1166, %v1159, %v1163
  %v1168 = vand.u32 2147483647, %v846
  %vm1169 = vcmp.eq.f32.partialorder %v1168, 8.507059e+37
  %v1170 = vand.u32 %v846, 2147483648
  %v1171 = vor.u32 1.1754944e-38, %v1170
  %v1172 = vsel %vm1169, %v1171, %v1167
  %v1173 = vmul.f32 %v722, %v1172
  %v1174 = vrcp.pop %v852
  %v1175 = vmul.f32 %v852, %v1174
  %v1176 = vsub.f32 1.0, %v1175
  %v1177 = vmul.f32 %v1174, %v1176
  %v1178 = vadd.f32 %v1174, %v1177
  %vm1179 = vweird.f32 %v852
  %vm1180 = vweird.f32 %v1174
  %vm1181 = vmor %vm1179, %vm1180
  %v1182 = vsel %vm1181, %v1174, %v1178
  %v1183 = vand.u32 2147483647, %v852
  %vm1184 = vcmp.eq.f32.partialorder %v1183, 8.507059e+37
  %v1185 = vand.u32 %v852, 2147483648
  %v1186 = vor.u32 1.1754944e-38, %v1185
  %v1187 = vsel %vm1184, %v1186, %v1182
  %v1188 = vmul.f32 %v724, %v1187
  %v1189 = vrcp.pop %v858
  %v1190 = vmul.f32 %v858, %v1189
  %v1191 = vsub.f32 1.0, %v1190
  %v1192 = vmul.f32 %v1189, %v1191
  %v1193 = vadd.f32 %v1189, %v1192
  %vm1194 = vweird.f32 %v858
  %vm1195 = vweird.f32 %v1189
  %vm1196 = vmor %vm1194, %vm1195
  %v1197 = vsel %vm1196, %v1189, %v1193
  %v1198 = vand.u32 2147483647, %v858
  %vm1199 = vcmp.eq.f32.partialorder %v1198, 8.507059e+37
  %v1200 = vand.u32 %v858, 2147483648
  %v1201 = vor.u32 1.1754944e-38, %v1200
  %v1202 = vsel %vm1199, %v1201, %v1197
  %v1203 = vmul.f32 %v726, %v1202
  %v1204 = vrcp.pop %v864
  %v1205 = vmul.f32 %v864, %v1204
  %v1206 = vsub.f32 1.0, %v1205
  %v1207 = vmul.f32 %v1204, %v1206
  %v1208 = vadd.f32 %v1204, %v1207
  %vm1209 = vweird.f32 %v864
  %vm1210 = vweird.f32 %v1204
  %vm1211 = vmor %vm1209, %vm1210
  %v1212 = vsel %vm1211, %v1204, %v1208
  %v1213 = vand.u32 2147483647, %v864
  %vm1214 = vcmp.eq.f32.partialorder %v1213, 8.507059e+37
  %v1215 = vand.u32 %v864, 2147483648
  %v1216 = vor.u32 1.1754944e-38, %v1215
  %v1217 = vsel %vm1214, %v1216, %v1212
  %v1218 = vmul.f32 %v728, %v1217
  %v1219 = vrcp.pop %v870
  %v1220 = vmul.f32 %v870, %v1219
  %v1221 = vsub.f32 1.0, %v1220
  %v1222 = vmul.f32 %v1219, %v1221
  %v1223 = vadd.f32 %v1219, %v1222
  %vm1224 = vweird.f32 %v870
  %vm1225 = vweird.f32 %v1219
  %vm1226 = vmor %vm1224, %vm1225
  %v1227 = vsel %vm1226, %v1219, %v1223
  %v1228 = vand.u32 2147483647, %v870
  %vm1229 = vcmp.eq.f32.partialorder %v1228, 8.507059e+37
  %v1230 = vand.u32 %v870, 2147483648
  %v1231 = vor.u32 1.1754944e-38, %v1230
  %v1232 = vsel %vm1229, %v1231, %v1227
  %v1233 = vmul.f32 %v730, %v1232
  %v1234 = vrcp.pop %v876
  %v1235 = vmul.f32 %v876, %v1234
  %v1236 = vsub.f32 1.0, %v1235
  %v1237 = vmul.f32 %v1234, %v1236
  %v1238 = vadd.f32 %v1234, %v1237
  %vm1239 = vweird.f32 %v876
  %vm1240 = vweird.f32 %v1234
  %vm1241 = vmor %vm1239, %vm1240
  %v1242 = vsel %vm1241, %v1234, %v1238
  %v1243 = vand.u32 2147483647, %v876
  %vm1244 = vcmp.eq.f32.partialorder %v1243, 8.507059e+37
  %v1245 = vand.u32 %v876, 2147483648
  %v1246 = vor.u32 1.1754944e-38, %v1245
  %v1247 = vsel %vm1244, %v1246, %v1242
  %v1248 = vmul.f32 %v732, %v1247
  %v1249 = vrcp.pop %v882
  %v1250 = vmul.f32 %v882, %v1249
  %v1251 = vsub.f32 1.0, %v1250
  %v1252 = vmul.f32 %v1249, %v1251
  %v1253 = vadd.f32 %v1249, %v1252
  %vm1254 = vweird.f32 %v882
  %vm1255 = vweird.f32 %v1249
  %vm1256 = vmor %vm1254, %vm1255
  %v1257 = vsel %vm1256, %v1249, %v1253
  %v1258 = vand.u32 2147483647, %v882
  %vm1259 = vcmp.eq.f32.partialorder %v1258, 8.507059e+37
  %v1260 = vand.u32 %v882, 2147483648
  %v1261 = vor.u32 1.1754944e-38, %v1260
  %v1262 = vsel %vm1259, %v1261, %v1257
  %v1263 = vmul.f32 %v734, %v1262
  %v1264 = vrcp.pop %v888
  %v1265 = vmul.f32 %v888, %v1264
  %v1266 = vsub.f32 1.0, %v1265
  %v1267 = vmul.f32 %v1264, %v1266
  %v1268 = vadd.f32 %v1264, %v1267
  %vm1269 = vweird.f32 %v888
  %vm1270 = vweird.f32 %v1264
  %vm1271 = vmor %vm1269, %vm1270
  %v1272 = vsel %vm1271, %v1264, %v1268
  %v1273 = vand.u32 2147483647, %v888
  %vm1274 = vcmp.eq.f32.partialorder %v1273, 8.507059e+37
  %v1275 = vand.u32 %v888, 2147483648
  %v1276 = vor.u32 1.1754944e-38, %v1275
  %v1277 = vsel %vm1274, %v1276, %v1272
  %v1278 = vmul.f32 %v736, %v1277
  %v1279 = vrcp.pop %v894
  %v1280 = vmul.f32 %v894, %v1279
  %v1281 = vsub.f32 1.0, %v1280
  %v1282 = vmul.f32 %v1279, %v1281
  %v1283 = vadd.f32 %v1279, %v1282
  %vm1284 = vweird.f32 %v894
  %vm1285 = vweird.f32 %v1279
  %vm1286 = vmor %vm1284, %vm1285
  %v1287 = vsel %vm1286, %v1279, %v1283
  %v1288 = vand.u32 2147483647, %v894
  %vm1289 = vcmp.eq.f32.partialorder %v1288, 8.507059e+37
  %v1290 = vand.u32 %v894, 2147483648
  %v1291 = vor.u32 1.1754944e-38, %v1290
  %v1292 = vsel %vm1289, %v1291, %v1287
  %v1293 = vmul.f32 %v738, %v1292
  %v1294 = vrcp.pop %v900
  %v1295 = vmul.f32 %v900, %v1294
  %v1296 = vsub.f32 1.0, %v1295
  %v1297 = vmul.f32 %v1294, %v1296
  %v1298 = vadd.f32 %v1294, %v1297
  %vm1299 = vweird.f32 %v900
  %vm1300 = vweird.f32 %v1294
  %vm1301 = vmor %vm1299, %vm1300
  %v1302 = vsel %vm1301, %v1294, %v1298
  %v1303 = vand.u32 2147483647, %v900
  %vm1304 = vcmp.eq.f32.partialorder %v1303, 8.507059e+37
  %v1305 = vand.u32 %v900, 2147483648
  %v1306 = vor.u32 1.1754944e-38, %v1305
  %v1307 = vsel %vm1304, %v1306, %v1302
  %v1308 = vmul.f32 %v740, %v1307
  %v1309 = vrcp.pop %v906
  %v1310 = vmul.f32 %v906, %v1309
  %v1311 = vsub.f32 1.0, %v1310
  %v1312 = vmul.f32 %v1309, %v1311
  %v1313 = vadd.f32 %v1309, %v1312
  %vm1314 = vweird.f32 %v906
  %vm1315 = vweird.f32 %v1309
  %vm1316 = vmor %vm1314, %vm1315
  %v1317 = vsel %vm1316, %v1309, %v1313
  %v1318 = vand.u32 2147483647, %v906
  %vm1319 = vcmp.eq.f32.partialorder %v1318, 8.507059e+37
  %v1320 = vand.u32 %v906, 2147483648
  %v1321 = vor.u32 1.1754944e-38, %v1320
  %v1322 = vsel %vm1319, %v1321, %v1317
  %v1323 = vmul.f32 %v742, %v1322
  %v1324 = vrcp.pop %v912
  %v1325 = vmul.f32 %v912, %v1324
  %v1326 = vsub.f32 1.0, %v1325
  %v1327 = vmul.f32 %v1324, %v1326
  %v1328 = vadd.f32 %v1324, %v1327
  %vm1329 = vweird.f32 %v912
  %vm1330 = vweird.f32 %v1324
  %vm1331 = vmor %vm1329, %vm1330
  %v1332 = vsel %vm1331, %v1324, %v1328
  %v1333 = vand.u32 2147483647, %v912
  %vm1334 = vcmp.eq.f32.partialorder %v1333, 8.507059e+37
  %v1335 = vand.u32 %v912, 2147483648
  %v1336 = vor.u32 1.1754944e-38, %v1335
  %v1337 = vsel %vm1334, %v1336, %v1332
  %v1338 = vmul.f32 %v744, %v1337
  %v1339 = vrcp.pop %v918
  %v1340 = vmul.f32 %v918, %v1339
  %v1341 = vsub.f32 1.0, %v1340
  %v1342 = vmul.f32 %v1339, %v1341
  %v1343 = vadd.f32 %v1339, %v1342
  %vm1344 = vweird.f32 %v918
  %vm1345 = vweird.f32 %v1339
  %vm1346 = vmor %vm1344, %vm1345
  %v1347 = vsel %vm1346, %v1339, %v1343
  %v1348 = vand.u32 2147483647, %v918
  %vm1349 = vcmp.eq.f32.partialorder %v1348, 8.507059e+37
  %v1350 = vand.u32 %v918, 2147483648
  %v1351 = vor.u32 1.1754944e-38, %v1350
  %v1352 = vsel %vm1349, %v1351, %v1347
  %v1353 = vmul.f32 %v746, %v1352
  %v1354 = vrcp.pop %v924
  %v1355 = vmul.f32 %v924, %v1354
  %v1356 = vsub.f32 1.0, %v1355
  %v1357 = vmul.f32 %v1354, %v1356
  %v1358 = vadd.f32 %v1354, %v1357
  %vm1359 = vweird.f32 %v924
  %vm1360 = vweird.f32 %v1354
  %vm1361 = vmor %vm1359, %vm1360
  %v1362 = vsel %vm1361, %v1354, %v1358
  %v1363 = vand.u32 2147483647, %v924
  %vm1364 = vcmp.eq.f32.partialorder %v1363, 8.507059e+37
  %v1365 = vand.u32 %v924, 2147483648
  %v1366 = vor.u32 1.1754944e-38, %v1365
  %v1367 = vsel %vm1364, %v1366, %v1362
  %v1368 = vmul.f32 %v748, %v1367
  %v1369 = vrcp.pop %v930
  %v1370 = vmul.f32 %v930, %v1369
  %v1371 = vsub.f32 1.0, %v1370
  %v1372 = vmul.f32 %v1369, %v1371
  %v1373 = vadd.f32 %v1369, %v1372
  %vm1374 = vweird.f32 %v930
  %vm1375 = vweird.f32 %v1369
  %vm1376 = vmor %vm1374, %vm1375
  %v1377 = vsel %vm1376, %v1369, %v1373
  %v1378 = vand.u32 2147483647, %v930
  %vm1379 = vcmp.eq.f32.partialorder %v1378, 8.507059e+37
  %v1380 = vand.u32 %v930, 2147483648
  %v1381 = vor.u32 1.1754944e-38, %v1380
  %v1382 = vsel %vm1379, %v1381, %v1377
  %v1383 = vmul.f32 %v750, %v1382
  %v1384 = vrcp.pop %v936
  %v1385 = vmul.f32 %v936, %v1384
  %v1386 = vsub.f32 1.0, %v1385
  %v1387 = vmul.f32 %v1384, %v1386
  %v1388 = vadd.f32 %v1384, %v1387
  %vm1389 = vweird.f32 %v936
  %vm1390 = vweird.f32 %v1384
  %vm1391 = vmor %vm1389, %vm1390
  %v1392 = vsel %vm1391, %v1384, %v1388
  %v1393 = vand.u32 2147483647, %v936
  %vm1394 = vcmp.eq.f32.partialorder %v1393, 8.507059e+37
  %v1395 = vand.u32 %v936, 2147483648
  %v1396 = vor.u32 1.1754944e-38, %v1395
  %v1397 = vsel %vm1394, %v1396, %v1392
  %v1398 = vmul.f32 %v752, %v1397
  %v1399 = vrcp.pop %v942
  %v1400 = vmul.f32 %v942, %v1399
  %v1401 = vsub.f32 1.0, %v1400
  %v1402 = vmul.f32 %v1399, %v1401
  %v1403 = vadd.f32 %v1399, %v1402
  %vm1404 = vweird.f32 %v942
  %vm1405 = vweird.f32 %v1399
  %vm1406 = vmor %vm1404, %vm1405
  %v1407 = vsel %vm1406, %v1399, %v1403
  %v1408 = vand.u32 2147483647, %v942
  %vm1409 = vcmp.eq.f32.partialorder %v1408, 8.507059e+37
  %v1410 = vand.u32 %v942, 2147483648
  %v1411 = vor.u32 1.1754944e-38, %v1410
  %v1412 = vsel %vm1409, %v1411, %v1407
  %v1413 = vmul.f32 %v754, %v1412
  %v1414 = vrcp.pop %v948
  %v1415 = vmul.f32 %v948, %v1414
  %v1416 = vsub.f32 1.0, %v1415
  %v1417 = vmul.f32 %v1414, %v1416
  %v1418 = vadd.f32 %v1414, %v1417
  %vm1419 = vweird.f32 %v948
  %vm1420 = vweird.f32 %v1414
  %vm1421 = vmor %vm1419, %vm1420
  %v1422 = vsel %vm1421, %v1414, %v1418
  %v1423 = vand.u32 2147483647, %v948
  %vm1424 = vcmp.eq.f32.partialorder %v1423, 8.507059e+37
  %v1425 = vand.u32 %v948, 2147483648
  %v1426 = vor.u32 1.1754944e-38, %v1425
  %v1427 = vsel %vm1424, %v1426, %v1422
  %v1428 = vmul.f32 %v756, %v1427
  %v1429 = vmul.f32 %v963, %v23
  %v1430 = vmul.f32 %v978, %v24
  %v1431 = vmul.f32 %v993, %v25
  %v1432 = vmul.f32 %v1008, %v26
  %v1433 = vmul.f32 %v1023, %v27
  %v1434 = vmul.f32 %v1038, %v28
  %v1435 = vmul.f32 %v1053, %v29
  %v1436 = vmul.f32 %v1068, %v30
  %v1437 = vmul.f32 %v1083, %v31
  %v1438 = vmul.f32 %v1098, %v32
  %v1439 = vmul.f32 %v1113, %v33
  %v1440 = vmul.f32 %v1128, %v34
  %v1441 = vmul.f32 %v1143, %v35
  %v1442 = vmul.f32 %v1158, %v36
  %v1443 = vmul.f32 %v1173, %v37
  %v1444 = vmul.f32 %v1188, %v38
  %v1445 = vmul.f32 %v1203, %v39
  %v1446 = vmul.f32 %v1218, %v40
  %v1447 = vmul.f32 %v1233, %v41
  %v1448 = vmul.f32 %v1248, %v42
  %v1449 = vmul.f32 %v1263, %v43
  %v1450 = vmul.f32 %v1278, %v44
  %v1451 = vmul.f32 %v1293, %v45
  %v1452 = vmul.f32 %v1308, %v46
  %v1453 = vmul.f32 %v1323, %v47
  %v1454 = vmul.f32 %v1338, %v48
  %v1455 = vmul.f32 %v1353, %v49
  %v1456 = vmul.f32 %v1368, %v50
  %v1457 = vmul.f32 %v1383, %v51
  %v1458 = vmul.f32 %v1398, %v52
  %v1459 = vmul.f32 %v1413, %v53
  %v1460 = vmul.f32 %v1428, %v54
  %v1461 = vsel %vm63, %v1429, 0.0
  %v1462 = vrot.slane %v1461, 4
  %v1463 = vadd.f32 %v1461, %v1462
  %v1464 = vrot.slane %v1463, 2
  %v1465 = vadd.f32 %v1463, %v1464
  %v1466 = vrot.slane %v1465, 1
  %v1467 = vadd.f32 %v1465, %v1466
  %v1468 = vsel %vm63, %v1430, 0.0
  %v1469 = vrot.slane %v1468, 4
  %v1470 = vadd.f32 %v1468, %v1469
  %v1471 = vrot.slane %v1470, 2
  %v1472 = vadd.f32 %v1470, %v1471
  %v1473 = vrot.slane %v1472, 1
  %v1474 = vadd.f32 %v1472, %v1473
  %v1475 = vsel %vm63, %v1431, 0.0
  %v1476 = vrot.slane %v1475, 4
  %v1477 = vadd.f32 %v1475, %v1476
  %v1478 = vrot.slane %v1477, 2
  %v1479 = vadd.f32 %v1477, %v1478
  %v1480 = vrot.slane %v1479, 1
  %v1481 = vadd.f32 %v1479, %v1480
  %v1482 = vsel %vm63, %v1432, 0.0
  %v1483 = vrot.slane %v1482, 4
  %v1484 = vadd.f32 %v1482, %v1483
  %v1485 = vrot.slane %v1484, 2
  %v1486 = vadd.f32 %v1484, %v1485
  %v1487 = vrot.slane %v1486, 1
  %v1488 = vadd.f32 %v1486, %v1487
  %v1489 = vsel %vm63, %v1433, 0.0
  %v1490 = vrot.slane %v1489, 4
  %v1491 = vadd.f32 %v1489, %v1490
  %v1492 = vrot.slane %v1491, 2
  %v1493 = vadd.f32 %v1491, %v1492
  %v1494 = vrot.slane %v1493, 1
  %v1495 = vadd.f32 %v1493, %v1494
  %v1496 = vsel %vm63, %v1434, 0.0
  %v1497 = vrot.slane %v1496, 4
  %v1498 = vadd.f32 %v1496, %v1497
  %v1499 = vrot.slane %v1498, 2
  %v1500 = vadd.f32 %v1498, %v1499
  %v1501 = vrot.slane %v1500, 1
  %v1502 = vadd.f32 %v1500, %v1501
  %v1503 = vsel %vm63, %v1435, 0.0
  %v1504 = vrot.slane %v1503, 4
  %v1505 = vadd.f32 %v1503, %v1504
  %v1506 = vrot.slane %v1505, 2
  %v1507 = vadd.f32 %v1505, %v1506
  %v1508 = vrot.slane %v1507, 1
  %v1509 = vadd.f32 %v1507, %v1508
  %v1510 = vsel %vm63, %v1436, 0.0
  %v1511 = vrot.slane %v1510, 4
  %v1512 = vadd.f32 %v1510, %v1511
  %v1513 = vrot.slane %v1512, 2
  %v1514 = vadd.f32 %v1512, %v1513
  %v1515 = vrot.slane %v1514, 1
  %v1516 = vadd.f32 %v1514, %v1515
  %v1517 = vsel %vm63, %v1437, 0.0
  %v1518 = vrot.slane %v1517, 4
  %v1519 = vadd.f32 %v1517, %v1518
  %v1520 = vrot.slane %v1519, 2
  %v1521 = vadd.f32 %v1519, %v1520
  %v1522 = vrot.slane %v1521, 1
  %v1523 = vadd.f32 %v1521, %v1522
  %v1524 = vsel %vm63, %v1438, 0.0
  %v1525 = vrot.slane %v1524, 4
  %v1526 = vadd.f32 %v1524, %v1525
  %v1527 = vrot.slane %v1526, 2
  %v1528 = vadd.f32 %v1526, %v1527
  %v1529 = vrot.slane %v1528, 1
  %v1530 = vadd.f32 %v1528, %v1529
  %v1531 = vsel %vm63, %v1439, 0.0
  %v1532 = vrot.slane %v1531, 4
  %v1533 = vadd.f32 %v1531, %v1532
  %v1534 = vrot.slane %v1533, 2
  %v1535 = vadd.f32 %v1533, %v1534
  %v1536 = vrot.slane %v1535, 1
  %v1537 = vadd.f32 %v1535, %v1536
  %v1538 = vsel %vm63, %v1440, 0.0
  %v1539 = vrot.slane %v1538, 4
  %v1540 = vadd.f32 %v1538, %v1539
  %v1541 = vrot.slane %v1540, 2
  %v1542 = vadd.f32 %v1540, %v1541
  %v1543 = vrot.slane %v1542, 1
  %v1544 = vadd.f32 %v1542, %v1543
  %v1545 = vsel %vm63, %v1441, 0.0
  %v1546 = vrot.slane %v1545, 4
  %v1547 = vadd.f32 %v1545, %v1546
  %v1548 = vrot.slane %v1547, 2
  %v1549 = vadd.f32 %v1547, %v1548
  %v1550 = vrot.slane %v1549, 1
  %v1551 = vadd.f32 %v1549, %v1550
  %v1552 = vsel %vm63, %v1442, 0.0
  %v1553 = vrot.slane %v1552, 4
  %v1554 = vadd.f32 %v1552, %v1553
  %v1555 = vrot.slane %v1554, 2
  %v1556 = vadd.f32 %v1554, %v1555
  %v1557 = vrot.slane %v1556, 1
  %v1558 = vadd.f32 %v1556, %v1557
  %v1559 = vsel %vm63, %v1443, 0.0
  %v1560 = vrot.slane %v1559, 4
  %v1561 = vadd.f32 %v1559, %v1560
  %v1562 = vrot.slane %v1561, 2
  %v1563 = vadd.f32 %v1561, %v1562
  %v1564 = vrot.slane %v1563, 1
  %v1565 = vadd.f32 %v1563, %v1564
  %v1566 = vsel %vm63, %v1444, 0.0
  %v1567 = vrot.slane %v1566, 4
  %v1568 = vadd.f32 %v1566, %v1567
  %v1569 = vrot.slane %v1568, 2
  %v1570 = vadd.f32 %v1568, %v1569
  %v1571 = vrot.slane %v1570, 1
  %v1572 = vadd.f32 %v1570, %v1571
  %v1573 = vsel %vm63, %v1445, 0.0
  %v1574 = vrot.slane %v1573, 4
  %v1575 = vadd.f32 %v1573, %v1574
  %v1576 = vrot.slane %v1575, 2
  %v1577 = vadd.f32 %v1575, %v1576
  %v1578 = vrot.slane %v1577, 1
  %v1579 = vadd.f32 %v1577, %v1578
  %v1580 = vsel %vm63, %v1446, 0.0
  %v1581 = vrot.slane %v1580, 4
  %v1582 = vadd.f32 %v1580, %v1581
  %v1583 = vrot.slane %v1582, 2
  %v1584 = vadd.f32 %v1582, %v1583
  %v1585 = vrot.slane %v1584, 1
  %v1586 = vadd.f32 %v1584, %v1585
  %v1587 = vsel %vm63, %v1447, 0.0
  %v1588 = vrot.slane %v1587, 4
  %v1589 = vadd.f32 %v1587, %v1588
  %v1590 = vrot.slane %v1589, 2
  %v1591 = vadd.f32 %v1589, %v1590
  %v1592 = vrot.slane %v1591, 1
  %v1593 = vadd.f32 %v1591, %v1592
  %v1594 = vsel %vm63, %v1448, 0.0
  %v1595 = vrot.slane %v1594, 4
  %v1596 = vadd.f32 %v1594, %v1595
  %v1597 = vrot.slane %v1596, 2
  %v1598 = vadd.f32 %v1596, %v1597
  %v1599 = vrot.slane %v1598, 1
  %v1600 = vadd.f32 %v1598, %v1599
  %v1601 = vsel %vm63, %v1449, 0.0
  %v1602 = vrot.slane %v1601, 4
  %v1603 = vadd.f32 %v1601, %v1602
  %v1604 = vrot.slane %v1603, 2
  %v1605 = vadd.f32 %v1603, %v1604
  %v1606 = vrot.slane %v1605, 1
  %v1607 = vadd.f32 %v1605, %v1606
  %v1608 = vsel %vm63, %v1450, 0.0
  %v1609 = vrot.slane %v1608, 4
  %v1610 = vadd.f32 %v1608, %v1609
  %v1611 = vrot.slane %v1610, 2
  %v1612 = vadd.f32 %v1610, %v1611
  %v1613 = vrot.slane %v1612, 1
  %v1614 = vadd.f32 %v1612, %v1613
  %v1615 = vsel %vm63, %v1451, 0.0
  %v1616 = vrot.slane %v1615, 4
  %v1617 = vadd.f32 %v1615, %v1616
  %v1618 = vrot.slane %v1617, 2
  %v1619 = vadd.f32 %v1617, %v1618
  %v1620 = vrot.slane %v1619, 1
  %v1621 = vadd.f32 %v1619, %v1620
  %v1622 = vsel %vm63, %v1452, 0.0
  %v1623 = vrot.slane %v1622, 4
  %v1624 = vadd.f32 %v1622, %v1623
  %v1625 = vrot.slane %v1624, 2
  %v1626 = vadd.f32 %v1624, %v1625
  %v1627 = vrot.slane %v1626, 1
  %v1628 = vadd.f32 %v1626, %v1627
  %v1629 = vsel %vm63, %v1453, 0.0
  %v1630 = vrot.slane %v1629, 4
  %v1631 = vadd.f32 %v1629, %v1630
  %v1632 = vrot.slane %v1631, 2
  %v1633 = vadd.f32 %v1631, %v1632
  %v1634 = vrot.slane %v1633, 1
  %v1635 = vadd.f32 %v1633, %v1634
  %v1636 = vsel %vm63, %v1454, 0.0
  %v1637 = vrot.slane %v1636, 4
  %v1638 = vadd.f32 %v1636, %v1637
  %v1639 = vrot.slane %v1638, 2
  %v1640 = vadd.f32 %v1638, %v1639
  %v1641 = vrot.slane %v1640, 1
  %v1642 = vadd.f32 %v1640, %v1641
  %v1643 = vsel %vm63, %v1455, 0.0
  %v1644 = vrot.slane %v1643, 4
  %v1645 = vadd.f32 %v1643, %v1644
  %v1646 = vrot.slane %v1645, 2
  %v1647 = vadd.f32 %v1645, %v1646
  %v1648 = vrot.slane %v1647, 1
  %v1649 = vadd.f32 %v1647, %v1648
  %v1650 = vsel %vm63, %v1456, 0.0
  %v1651 = vrot.slane %v1650, 4
  %v1652 = vadd.f32 %v1650, %v1651
  %v1653 = vrot.slane %v1652, 2
  %v1654 = vadd.f32 %v1652, %v1653
  %v1655 = vrot.slane %v1654, 1
  %v1656 = vadd.f32 %v1654, %v1655
  %v1657 = vsel %vm63, %v1457, 0.0
  %v1658 = vrot.slane %v1657, 4
  %v1659 = vadd.f32 %v1657, %v1658
  %v1660 = vrot.slane %v1659, 2
  %v1661 = vadd.f32 %v1659, %v1660
  %v1662 = vrot.slane %v1661, 1
  %v1663 = vadd.f32 %v1661, %v1662
  %v1664 = vsel %vm63, %v1458, 0.0
  %v1665 = vrot.slane %v1664, 4
  %v1666 = vadd.f32 %v1664, %v1665
  %v1667 = vrot.slane %v1666, 2
  %v1668 = vadd.f32 %v1666, %v1667
  %v1669 = vrot.slane %v1668, 1
  %v1670 = vadd.f32 %v1668, %v1669
  %v1671 = vsel %vm63, %v1459, 0.0
  %v1672 = vrot.slane %v1671, 4
  %v1673 = vadd.f32 %v1671, %v1672
  %v1674 = vrot.slane %v1673, 2
  %v1675 = vadd.f32 %v1673, %v1674
  %v1676 = vrot.slane %v1675, 1
  %v1677 = vadd.f32 %v1675, %v1676
  %v1678 = vsel %vm63, %v1460, 0.0
  %v1679 = vrot.slane %v1678, 4
  %v1680 = vadd.f32 %v1678, %v1679
  %v1681 = vrot.slane %v1680, 2
  %v1682 = vadd.f32 %v1680, %v1681
  %v1683 = vrot.slane %v1682, 1
  %v1684 = vadd.f32 %v1682, %v1683
  %v1685 = vld [vmem:[%s4] sm:$0xff]
  %v1686 = vld [vmem:[%s4 + $0x8] sm:$0xff]
  %v1687 = vld [vmem:[%s4 + $0x10] sm:$0xff]
  %v1688 = vld [vmem:[%s4 + $0x18] sm:$0xff]
  %v1689 = vld [vmem:[%s5] sm:$0x1]
  %v1691 = vperm.slane %v1689, 0
  %vm1725 = vcmask 1041409
  %v1726 = vsel %vm1725, %v1474, %v1467
  %vm1727 = vcmask 1042434
  %v1728 = vsel %vm1727, %v1481, %v1726
  %vm1729 = vcmask 1043459
  %v1730 = vsel %vm1729, %v1488, %v1728
  %vm1731 = vcmask 1044484
  %v1732 = vsel %vm1731, %v1495, %v1730
  %vm1733 = vcmask 1045509
  %v1734 = vsel %vm1733, %v1502, %v1732
  %vm1735 = vcmask 1046534
  %v1736 = vsel %vm1735, %v1509, %v1734
  %vm1737 = vcmask 1047559
  %v1738 = vsel %vm1737, %v1516, %v1736
  %v1739 = vsel %vm1725, %v1530, %v1523
  %v1740 = vsel %vm1727, %v1537, %v1739
  %v1741 = vsel %vm1729, %v1544, %v1740
  %v1742 = vsel %vm1731, %v1551, %v1741
  %v1743 = vsel %vm1733, %v1558, %v1742
  %v1744 = vsel %vm1735, %v1565, %v1743
  %v1745 = vsel %vm1737, %v1572, %v1744
  %v1746 = vsel %vm1725, %v1586, %v1579
  %v1747 = vsel %vm1727, %v1593, %v1746
  %v1748 = vsel %vm1729, %v1600, %v1747
  %v1749 = vsel %vm1731, %v1607, %v1748
  %v1750 = vsel %vm1733, %v1614, %v1749
  %v1751 = vsel %vm1735, %v1621, %v1750
  %v1752 = vsel %vm1737, %v1628, %v1751
  %v1753 = vsel %vm1725, %v1642, %v1635
  %v1754 = vsel %vm1727, %v1649, %v1753
  %v1755 = vsel %vm1729, %v1656, %v1754
  %v1756 = vsel %vm1731, %v1663, %v1755
  %v1757 = vsel %vm1733, %v1670, %v1756
  %v1758 = vsel %vm1735, %v1677, %v1757
  %v1759 = vsel %vm1737, %v1684, %v1758
  %v1760 = vsel %vm63, %v1738, 0
  %v1762 = vsel %vm63, %v1745, 0
  %v1764 = vsel %vm63, %v1752, 0
  %v1766 = vsel %vm63, %v1759, 0
  %1768 = vmatpush.msra.mxu0 0.0
  %1769 = vmatpush.msra.mxu0 0.0
  %1770 = vmatpush.msra.mxu0 0.0
  %1771 = vmatpush.msra.mxu0 0.0
  %1772 = vmatpush.msra.mxu0 0.0
  %1773 = vmatpush.msra.mxu0 0.0
  %1774 = vmatpush.msra.mxu0 0.0
  %1775 = vmatpush.msra.mxu0 0.0
  %1776 = vmatpush.msra.mxu0 0.0
  %1777 = vmatpush.msra.mxu0 0.0
  %1778 = vmatpush.msra.mxu0 0.0
  %1779 = vmatpush.msra.mxu0 0.0
  %1780 = vmatpush.msra.mxu0 %v1688
  %1781 = vmatpush.msra.mxu0 %v1687
  %1782 = vmatpush.msra.mxu0 %v1686
  %1783 = vmatpush.msra.mxu0 %v1685
  %1784 = vmatmul.f32.gmra.mxu0 %v1760
  %v1785 = vpop.f32.mrf.mxu0
  %v1786 = vadd.f32 %v1691, %v1785
  %1787 = vmatmul.f32.gmra.mxu0 %v1762
  %v1788 = vpop.f32.mrf.mxu0
  %v1789 = vadd.f32 %v1691, %v1788
  %1790 = vmatmul.f32.gmra.mxu0 %v1764
  %v1791 = vpop.f32.mrf.mxu0
  %v1792 = vadd.f32 %v1691, %v1791
  %1793 = vmatmul.f32.gmra.mxu0 %v1766
  %v1794 = vpop.f32.mrf.mxu0
  %v1795 = vadd.f32 %v1691, %v1794
  %1796 = vdwg.mxu0
  %v1797 = vmax.f32 %v1786, 0.0
  %v1798 = vmax.f32 %v1789, 0.0
  %v1799 = vmax.f32 %v1792, 0.0
  %v1800 = vmax.f32 %v1795, 0.0
  %1801 = vst.msk [vmem:[%s6] sm:$0xff] %vm63, %v1797
  %1802 = vst.msk [vmem:[%s6 + $0x8] sm:$0xff] %vm63, %v1798
  %1803 = vst.msk [vmem:[%s6 + $0x10] sm:$0xff] %vm63, %v1799
  %1804 = vst.msk [vmem:[%s6 + $0x18] sm:$0xff] %vm63, %v1800
  // Predicated region
  $region26: #{attention_forward.1} parent=0 // pred_check
    _
  $region27: #{attention_forward.1} parent=0 // pred_check_branch
    %1806 = sbr.rel (0) target = $region29
  $region28: #{attention_forward.1} parent=0 // pred_region
    _
  $region29: #{attention_forward.1} parent=0 // pred_fallthru
    _
  // Predicated region
  $region30: #{attention_forward.1} parent=0 // pred_check
    _
  $region31: #{attention_forward.1} parent=0 // pred_check_branch
    %1808 = sbr.rel (0) target = $region33
  $region32: #{attention_forward.1} parent=0 // pred_region
    _
  $region33: #{attention_forward.1} parent=0 // pred_fallthru
    _

</llo_original>
